<compile_context>
chip_gen: v5e
topology: v5e:2x2
jax: 0.10.0
libtpu: 0.0.40
codegen_flags: <defaults>
</compile_context>

<pallas_src>
import jax
import jax.numpy as jnp
from jax import lax
from jax.experimental import pallas as pl
from jax.experimental.pallas import tpu as pltpu

MID = 64  # hidden width of the block (conv1/conv2 output channels)


# ----------------------------- Pallas kernel --------------------------------

def _make_block_kernel(H, W, IC, OC, has_proj):
    """Fused conv1+BN2+ReLU -> conv2(3x3)+BN3+ReLU -> conv3(+conv4) + residual.

    Internal layout is channels-first with spatial flattened on lanes:
    every activation is (channels, H*W), so all three convs are MXU matmuls
    whose N (lane) dimension is H*W (lane-dense), and the NCHW HBM layout maps
    onto the kernel with contiguous reshapes only.
    """
    HW = H * W

    def kernel(x_ref, w1_ref, s1_ref, b1_ref, w2_ref, s2_ref, b2_ref,
               w34_ref, o_ref):
        x = x_ref[0]                               # (IC, H*W), f32
        x_mm = x.astype(jnp.bfloat16)              # bf16 operand for the MXU

        # ---- conv1 (1x1) on the MXU + folded BN2 + ReLU (f32 epilogue) ----
        t1 = jnp.dot(w1_ref[...], x_mm,
                     preferred_element_type=jnp.float32)        # (MID, HW)
        t1 = jnp.maximum(t1 * s1_ref[...] + b1_ref[...], 0.0)

        # ---- conv2 (3x3, pad=1, stride=1) as ONE K=9*MID matmul -----------
        # Zero-pad t1 by (W+1) lanes on each side; every tap (dh, dw) is then
        # a static lane-shifted slice of this single padded value (the zero
        # fill handles rows that fall off the top/bottom of the image), plus
        # a cheap VPU mask for the left/right image border so row wrap-around
        # never leaks across columns.  No VMEM scratch, no cross-step state.
        zpad = jnp.zeros((MID, W + 1), jnp.float32)
        t1p = jnp.concatenate([zpad, t1, zpad], axis=1)         # (MID, HW+2W+2)

        lane = lax.broadcasted_iota(jnp.int32, (MID, HW), 1)
        w_idx = lane % W
        keep_left = w_idx >= 1          # tap reads column w-1
        keep_right = w_idx <= W - 2     # tap reads column w+1

        taps = []
        for dh in (-1, 0, 1):
            for dw in (-1, 0, 1):
                start = (W + 1) + dh * W + dw
                p = t1p[:, start:start + HW]                    # (MID, HW)
                if dw == -1:
                    p = jnp.where(keep_left, p, 0.0)
                elif dw == 1:
                    p = jnp.where(keep_right, p, 0.0)
                taps.append(p.astype(jnp.bfloat16))
        patches = jnp.concatenate(taps, axis=0)                 # (9*MID, HW)

        t2 = jnp.dot(w2_ref[...], patches,
                     preferred_element_type=jnp.float32)        # (MID, HW)
        t2 = jnp.maximum(t2 * s2_ref[...] + b2_ref[...], 0.0)
        t2b = t2.astype(jnp.bfloat16)

        # ---- conv3 (1x1) fused with the residual branch -------------------
        if has_proj:
            # [w3 | w4] @ [t2 ; x]  ->  conv3(t2) + conv4(x) in one matmul.
            kcat = jnp.concatenate([t2b, x_mm], axis=0)         # (MID+IC, HW)
            out = jnp.dot(w34_ref[...], kcat,
                          preferred_element_type=jnp.float32)   # (OC, HW)
        else:
            # identity shortcut: add the untouched f32 input.
            out = jnp.dot(w34_ref[...], t2b,
                          preferred_element_type=jnp.float32) + x

        o_ref[0] = out.astype(o_ref.dtype)                      # lane-dense store

    return kernel


# ------------------------------ wrapper --------------------------------------

def residual_block_forward(x_nchw, params, stride=1):
    N, IC, H, W = x_nchw.shape
    OC = params["w3"].shape[0]
    has_proj = "w4" in params
    if not has_proj:
        # PyTorch's identity shortcut only type-checks for IC == OC, stride == 1.
        assert IC == OC and stride == 1
    HW = H * W

    # NCHW stays NCHW: (N, C, H, W) -> (N, C, H*W) is a free contiguous
    # reshape, so there is no HBM transpose on either side of the kernel.
    x = x_nchw.reshape(N, IC, HW).astype(jnp.float32)

    # PyTorch OIHW weights -> MXU-friendly (out, k) matrices, cast to bf16.
    w1m = params["w1"].reshape(MID, IC).astype(jnp.bfloat16)
    # conv2 taps ordered (di, dj, ic) to match the kernel's patch concat order.
    w2m = jnp.transpose(params["w2"], (0, 2, 3, 1)).reshape(MID, 9 * MID)
    w2m = w2m.astype(jnp.bfloat16)
    w3m = params["w3"].reshape(OC, MID)
    if has_proj:
        w4m = params["w4"].reshape(OC, IC)
        w34m = jnp.concatenate([w3m, w4m], axis=1).astype(jnp.bfloat16)
        kw = MID + IC
    else:
        w34m = w3m.astype(jnp.bfloat16)
        kw = MID
    s1 = params["s1"].reshape(MID, 1).astype(jnp.float32)
    b1 = params["b1"].reshape(MID, 1).astype(jnp.float32)
    s2 = params["s2"].reshape(MID, 1).astype(jnp.float32)
    b2 = params["b2"].reshape(MID, 1).astype(jnp.float32)

    kernel = _make_block_kernel(H, W, IC, OC, has_proj)

    out = pl.pallas_call(
        kernel,
        out_shape=jax.ShapeDtypeStruct((N, OC, HW), jnp.float32),
        grid=(N,),
        in_specs=[
            pl.BlockSpec((1, IC, HW), lambda n: (n, 0, 0)),
            pl.BlockSpec((MID, IC), lambda n: (0, 0)),
            pl.BlockSpec((MID, 1), lambda n: (0, 0)),
            pl.BlockSpec((MID, 1), lambda n: (0, 0)),
            pl.BlockSpec((MID, 9 * MID), lambda n: (0, 0)),
            pl.BlockSpec((MID, 1), lambda n: (0, 0)),
            pl.BlockSpec((MID, 1), lambda n: (0, 0)),
            pl.BlockSpec((OC, kw), lambda n: (0, 0)),
        ],
        out_specs=pl.BlockSpec((1, OC, HW), lambda n: (n, 0, 0)),
        compiler_params=pltpu.CompilerParams(
            dimension_semantics=("parallel",)),   # legal: no cross-step state
    )(x, w1m, s1, b1, w2m, s2, b2, w34m)

    out = out.reshape(N, OC, H, W)                 # free contiguous reshape
    if stride > 1:
        # conv2's stride followed only by 1x1 convs => the strided block
        # output equals the stride-1 output subsampled at ::stride.
        # TODO(synk): for production stride>1 shapes, gather the strided taps
        #             inside the kernel instead of full-res + wrapper slice.
        out = out[:, :, ::stride, ::stride]
    return out


# --------------------------- params & reference ------------------------------

def make_params(ic, oc, key):
    ks = jax.random.split(key, 6)

    def conv_w(k, o, i, kh, kw):
        fan_in = i * kh * kw
        return jax.random.normal(k, (o, i, kh, kw), jnp.float32) / jnp.sqrt(fan_in)

    def bn_affine(k, c, eps=1e-5):
        kg, kb, km, kv = jax.random.split(k, 4)
        gamma = 1.0 + 0.1 * jax.random.normal(kg, (c,), jnp.float32)
        beta = 0.1 * jax.random.normal(kb, (c,), jnp.float32)
        mean = 0.1 * jax.random.normal(km, (c,), jnp.float32)
        var = 0.5 + 0.5 * jax.random.uniform(kv, (c,), jnp.float32)
        scale = gamma * jax.lax.rsqrt(var + eps)
        shift = beta - mean * scale
        return scale, shift

    p = {"w1": conv_w(ks[0], MID, ic, 1, 1),
         "w2": conv_w(ks[2], MID, MID, 3, 3),
         "w3": conv_w(ks[4], oc, MID, 1, 1)}
    p["s1"], p["b1"] = bn_affine(ks[1], MID)
    p["s2"], p["b2"] = bn_affine(ks[3], MID)
    if ic != oc:
        p["w4"] = conv_w(ks[5], oc, ic, 1, 1)
    return p


def reference_forward(x_nchw, params, stride=1):
    """Pure-JAX NCHW reference (lax convolutions, highest precision)."""
    dn = ("NCHW", "OIHW", "NCHW")

    def conv(v, w, s, pad):
        return lax.conv_general_dilated(
            v, w, (s, s), [(pad, pad), (pad, pad)],
            dimension_numbers=dn, precision=lax.Precision.HIGHEST)

    def bn_relu(v, s, b):
        return jnp.maximum(v * s[None, :, None, None] + b[None, :, None, None], 0.0)

    t = bn_relu(conv(x_nchw, params["w1"], 1, 0), params["s1"], params["b1"])
    t = bn_relu(conv(t, params["w2"], stride, 1), params["s2"], params["b2"])
    out = conv(t, params["w3"], 1, 0)
    res = conv(x_nchw, params["w4"], stride, 0) if "w4" in params else x_nchw
    return out + res


# --------------------------------- main ---------------------------------------

if __name__ == "__main__":
    key = jax.random.PRNGKey(0)
    kx, kp = jax.random.split(key)

    N, IC, H, W = 2, 16, 16, 16
    OC, STRIDE = 32, 1                       # IC != OC -> conv4 projection path

    x = jax.random.normal(kx, (N, IC, H, W), jnp.float32)
    params = make_params(IC, OC, kp)

    fwd = jax.jit(lambda v: residual_block_forward(v, params, STRIDE))
    out = fwd(x)
    jax.block_until_ready(out)

    assert out.shape == (N, OC, H, W), out.shape
    assert bool(jnp.all(jnp.isfinite(out)))

    ref = reference_forward(x, params, STRIDE)
    rel_err = float(jnp.max(jnp.abs(out - ref)) / (jnp.max(jnp.abs(ref)) + 1e-6))
    # bf16 MXU operands with f32 accumulation and f32 BN/ReLU epilogues;
    # tolerance sized for bf16 operand rounding (measured ~3e-3 typical).
    assert rel_err < 2e-2, rel_err

    print("KERNEL_OK")
</pallas_src>

<mosaic_0001>
module attributes {stable_mosaic.version = 11 : i64} {
  func.func @kernel(%arg0: i32, %arg1: memref<1x16x256xf32, #tpu.memory_space<vmem>>, %arg2: memref<64x16xbf16, #tpu.memory_space<vmem>>, %arg3: memref<64x1xf32, #tpu.memory_space<vmem>>, %arg4: memref<64x1xf32, #tpu.memory_space<vmem>>, %arg5: memref<64x576xbf16, #tpu.memory_space<vmem>>, %arg6: memref<64x1xf32, #tpu.memory_space<vmem>>, %arg7: memref<64x1xf32, #tpu.memory_space<vmem>>, %arg8: memref<32x80xbf16, #tpu.memory_space<vmem>>, %arg9: memref<1x32x256xf32, #tpu.memory_space<vmem>>) attributes {dimension_semantics = [#tpu.dimension_semantics<parallel>], iteration_bounds = array<i64: 2>, scalar_prefetch = 0 : i64, scratch_operands = 0 : i64, tpu.core_type = #tpu.core_type<tc>, window_params = [{transform_indices = @transform_0, window_bounds = array<i64: 1, 16, 256>}, {pipeline_mode = #tpu.pipeline_mode<synchronous>, transform_indices = @transform_1, window_bounds = array<i64: 64, 16>}, {pipeline_mode = #tpu.pipeline_mode<synchronous>, transform_indices = @transform_2, window_bounds = array<i64: 64, 1>}, {pipeline_mode = #tpu.pipeline_mode<synchronous>, transform_indices = @transform_3, window_bounds = array<i64: 64, 1>}, {pipeline_mode = #tpu.pipeline_mode<synchronous>, transform_indices = @transform_4, window_bounds = array<i64: 64, 576>}, {pipeline_mode = #tpu.pipeline_mode<synchronous>, transform_indices = @transform_5, window_bounds = array<i64: 64, 1>}, {pipeline_mode = #tpu.pipeline_mode<synchronous>, transform_indices = @transform_6, window_bounds = array<i64: 64, 1>}, {pipeline_mode = #tpu.pipeline_mode<synchronous>, transform_indices = @transform_7, window_bounds = array<i64: 32, 80>}, {transform_indices = @transform_8, window_bounds = array<i64: 1, 32, 256>}]} {
    %c0 = arith.constant 0 : index
    %c0_0 = arith.constant 0 : index
    %c0_1 = arith.constant 0 : index
    %0 = vector.load %arg1[%c0, %c0_0, %c0_1] : memref<1x16x256xf32, #tpu.memory_space<vmem>>, vector<1x16x256xf32>
    %1 = vector.shape_cast %0 : vector<1x16x256xf32> to vector<16x256xf32>
    %2 = arith.truncf %1 : vector<16x256xf32> to vector<16x256xbf16>
    %c0_2 = arith.constant 0 : index
    %c0_3 = arith.constant 0 : index
    %3 = vector.load %arg2[%c0_2, %c0_3] : memref<64x16xbf16, #tpu.memory_space<vmem>>, vector<64x16xbf16>
    %cst = arith.constant dense<0.000000e+00> : vector<64x256xf32>
    %4 = tpu.matmul %3, %2, %cst {dimension_numbers = #tpu.dot_dimension_numbers<[1], [0], [0], [1], [0, 0, 1, 1], [], []>} : vector<64x16xbf16>, vector<16x256xbf16>, vector<64x256xf32> -> vector<64x256xf32>
    %c0_4 = arith.constant 0 : index
    %c0_5 = arith.constant 0 : index
    %5 = vector.load %arg3[%c0_4, %c0_5] : memref<64x1xf32, #tpu.memory_space<vmem>>, vector<64x1xf32>
    %6 = vector.broadcast %5 : vector<64x1xf32> to vector<64x256xf32>
    %7 = arith.mulf %4, %6 : vector<64x256xf32>
    %c0_6 = arith.constant 0 : index
    %c0_7 = arith.constant 0 : index
    %8 = vector.load %arg4[%c0_6, %c0_7] : memref<64x1xf32, #tpu.memory_space<vmem>>, vector<64x1xf32>
    %9 = vector.broadcast %8 : vector<64x1xf32> to vector<64x256xf32>
    %10 = arith.addf %7, %9 : vector<64x256xf32>
    %cst_8 = arith.constant 0.000000e+00 : f32
    %11 = vector.broadcast %cst_8 : f32 to vector<64x256xf32>
    %12 = arith.maximumf %10, %11 : vector<64x256xf32>
    %cst_9 = arith.constant 0.000000e+00 : f32
    %13 = vector.broadcast %cst_9 : f32 to vector<64x17xf32>
    %14 = tpu.concatenate %13, %12, %13 in 1 : vector<64x17xf32>, vector<64x256xf32>, vector<64x17xf32> -> vector<64x290xf32>
    %15 = tpu.iota {dimensions = array<i32: 1>} : vector<64x256xi32>
    %c16_i32 = arith.constant 16 : i32
    %c0_i32 = arith.constant 0 : i32
    %16 = arith.cmpi eq, %c16_i32, %c0_i32 : i32
    %c1_i32 = arith.constant 1 : i32
    %17 = arith.select %16, %c1_i32, %c16_i32 : i32
    %18 = vector.broadcast %17 : i32 to vector<64x256xi32>
    %19 = arith.remsi %15, %18 : vector<64x256xi32>
    %c0_i32_10 = arith.constant 0 : i32
    %20 = vector.broadcast %c0_i32_10 : i32 to vector<64x256xi32>
    %21 = arith.cmpi ne, %19, %20 : vector<64x256xi32>
    %c0_i32_11 = arith.constant 0 : i32
    %22 = vector.broadcast %c0_i32_11 : i32 to vector<64x256xi32>
    %23 = arith.cmpi slt, %19, %22 : vector<64x256xi32>
    %c0_i32_12 = arith.constant 0 : i32
    %24 = arith.cmpi slt, %17, %c0_i32_12 : i32
    %25 = vector.broadcast %24 : i1 to vector<64x256xi1>
    %26 = vector.broadcast %25 : vector<64x256xi1> to vector<64x256xi1>
    %27 = arith.xori %23, %26 : vector<64x256xi1>
    %28 = arith.andi %27, %21 : vector<64x256xi1>
    %29 = vector.broadcast %17 : i32 to vector<64x256xi32>
    %30 = arith.addi %19, %29 : vector<64x256xi32>
    %31 = arith.select %28, %30, %19 : vector<64x256xi1>, vector<64x256xi32>
    %c1_i32_13 = arith.constant 1 : i32
    %32 = vector.broadcast %c1_i32_13 : i32 to vector<64x256xi32>
    %33 = arith.cmpi sge, %31, %32 : vector<64x256xi32>
    %c14_i32 = arith.constant 14 : i32
    %34 = vector.broadcast %c14_i32 : i32 to vector<64x256xi32>
    %35 = arith.cmpi sle, %31, %34 : vector<64x256xi32>
    %36 = vector.extract_strided_slice %14 {offsets = [0, 0], sizes = [64, 256], strides = [1, 1]} : vector<64x290xf32> to vector<64x256xf32>
    %cst_14 = arith.constant 0.000000e+00 : f32
    %37 = vector.broadcast %cst_14 : f32 to vector<64x256xf32>
    %38 = arith.select %33, %36, %37 : vector<64x256xi1>, vector<64x256xf32>
    %39 = arith.truncf %38 : vector<64x256xf32> to vector<64x256xbf16>
    %40 = vector.extract_strided_slice %14 {offsets = [0, 1], sizes = [64, 256], strides = [1, 1]} : vector<64x290xf32> to vector<64x256xf32>
    %41 = arith.truncf %40 : vector<64x256xf32> to vector<64x256xbf16>
    %42 = vector.extract_strided_slice %14 {offsets = [0, 2], sizes = [64, 256], strides = [1, 1]} : vector<64x290xf32> to vector<64x256xf32>
    %cst_15 = arith.constant 0.000000e+00 : f32
    %43 = vector.broadcast %cst_15 : f32 to vector<64x256xf32>
    %44 = arith.select %35, %42, %43 : vector<64x256xi1>, vector<64x256xf32>
    %45 = arith.truncf %44 : vector<64x256xf32> to vector<64x256xbf16>
    %46 = vector.extract_strided_slice %14 {offsets = [0, 16], sizes = [64, 256], strides = [1, 1]} : vector<64x290xf32> to vector<64x256xf32>
    %cst_16 = arith.constant 0.000000e+00 : f32
    %47 = vector.broadcast %cst_16 : f32 to vector<64x256xf32>
    %48 = arith.select %33, %46, %47 : vector<64x256xi1>, vector<64x256xf32>
    %49 = arith.truncf %48 : vector<64x256xf32> to vector<64x256xbf16>
    %50 = vector.extract_strided_slice %14 {offsets = [0, 17], sizes = [64, 256], strides = [1, 1]} : vector<64x290xf32> to vector<64x256xf32>
    %51 = arith.truncf %50 : vector<64x256xf32> to vector<64x256xbf16>
    %52 = vector.extract_strided_slice %14 {offsets = [0, 18], sizes = [64, 256], strides = [1, 1]} : vector<64x290xf32> to vector<64x256xf32>
    %cst_17 = arith.constant 0.000000e+00 : f32
    %53 = vector.broadcast %cst_17 : f32 to vector<64x256xf32>
    %54 = arith.select %35, %52, %53 : vector<64x256xi1>, vector<64x256xf32>
    %55 = arith.truncf %54 : vector<64x256xf32> to vector<64x256xbf16>
    %56 = vector.extract_strided_slice %14 {offsets = [0, 32], sizes = [64, 256], strides = [1, 1]} : vector<64x290xf32> to vector<64x256xf32>
    %cst_18 = arith.constant 0.000000e+00 : f32
    %57 = vector.broadcast %cst_18 : f32 to vector<64x256xf32>
    %58 = arith.select %33, %56, %57 : vector<64x256xi1>, vector<64x256xf32>
    %59 = arith.truncf %58 : vector<64x256xf32> to vector<64x256xbf16>
    %60 = vector.extract_strided_slice %14 {offsets = [0, 33], sizes = [64, 256], strides = [1, 1]} : vector<64x290xf32> to vector<64x256xf32>
    %61 = arith.truncf %60 : vector<64x256xf32> to vector<64x256xbf16>
    %62 = vector.extract_strided_slice %14 {offsets = [0, 34], sizes = [64, 256], strides = [1, 1]} : vector<64x290xf32> to vector<64x256xf32>
    %cst_19 = arith.constant 0.000000e+00 : f32
    %63 = vector.broadcast %cst_19 : f32 to vector<64x256xf32>
    %64 = arith.select %35, %62, %63 : vector<64x256xi1>, vector<64x256xf32>
    %65 = arith.truncf %64 : vector<64x256xf32> to vector<64x256xbf16>
    %66 = tpu.concatenate %39, %41, %45, %49, %51, %55, %59, %61, %65 in 0 : vector<64x256xbf16>, vector<64x256xbf16>, vector<64x256xbf16>, vector<64x256xbf16>, vector<64x256xbf16>, vector<64x256xbf16>, vector<64x256xbf16>, vector<64x256xbf16>, vector<64x256xbf16> -> vector<576x256xbf16>
    %c0_20 = arith.constant 0 : index
    %c0_21 = arith.constant 0 : index
    %67 = vector.load %arg5[%c0_20, %c0_21] : memref<64x576xbf16, #tpu.memory_space<vmem>>, vector<64x576xbf16>
    %cst_22 = arith.constant dense<0.000000e+00> : vector<64x256xf32>
    %68 = tpu.matmul %67, %66, %cst_22 {dimension_numbers = #tpu.dot_dimension_numbers<[1], [0], [0], [1], [0, 0, 1, 1], [], []>} : vector<64x576xbf16>, vector<576x256xbf16>, vector<64x256xf32> -> vector<64x256xf32>
    %c0_23 = arith.constant 0 : index
    %c0_24 = arith.constant 0 : index
    %69 = vector.load %arg6[%c0_23, %c0_24] : memref<64x1xf32, #tpu.memory_space<vmem>>, vector<64x1xf32>
    %70 = vector.broadcast %69 : vector<64x1xf32> to vector<64x256xf32>
    %71 = arith.mulf %68, %70 : vector<64x256xf32>
    %c0_25 = arith.constant 0 : index
    %c0_26 = arith.constant 0 : index
    %72 = vector.load %arg7[%c0_25, %c0_26] : memref<64x1xf32, #tpu.memory_space<vmem>>, vector<64x1xf32>
    %73 = vector.broadcast %72 : vector<64x1xf32> to vector<64x256xf32>
    %74 = arith.addf %71, %73 : vector<64x256xf32>
    %cst_27 = arith.constant 0.000000e+00 : f32
    %75 = vector.broadcast %cst_27 : f32 to vector<64x256xf32>
    %76 = arith.maximumf %74, %75 : vector<64x256xf32>
    %77 = arith.truncf %76 : vector<64x256xf32> to vector<64x256xbf16>
    %78 = tpu.concatenate %77, %2 in 0 : vector<64x256xbf16>, vector<16x256xbf16> -> vector<80x256xbf16>
    %c0_28 = arith.constant 0 : index
    %c0_29 = arith.constant 0 : index
    %79 = vector.load %arg8[%c0_28, %c0_29] : memref<32x80xbf16, #tpu.memory_space<vmem>>, vector<32x80xbf16>
    %cst_30 = arith.constant dense<0.000000e+00> : vector<32x256xf32>
    %80 = tpu.matmul %79, %78, %cst_30 {dimension_numbers = #tpu.dot_dimension_numbers<[1], [0], [0], [1], [0, 0, 1, 1], [], []>} : vector<32x80xbf16>, vector<80x256xbf16>, vector<32x256xf32> -> vector<32x256xf32>
    %c0_31 = arith.constant 0 : index
    %c0_32 = arith.constant 0 : index
    %c0_33 = arith.constant 0 : index
    %81 = vector.load %arg9[%c0_31, %c0_32, %c0_33] : memref<1x32x256xf32, #tpu.memory_space<vmem>>, vector<1x32x256xf32>
    %82 = vector.shape_cast %81 : vector<1x32x256xf32> to vector<32x256xf32>
    %83 = vector.shape_cast %80 : vector<32x256xf32> to vector<1x32x256xf32>
    tpu.vector_store %arg9[%c0_31, %c0_32, %c0_33], %83 {strides = array<i32>} : memref<1x32x256xf32, #tpu.memory_space<vmem>>, vector<1x32x256xf32>,
    return
  }
  func.func @transform_0(%arg0: i32) -> (i32, i32, i32) {
    %c0_i32 = arith.constant 0 : i32
    %c0_i32_0 = arith.constant 0 : i32
    %c0_i32_1 = arith.constant 0 : i32
    return %arg0, %c0_i32, %c0_i32_0 : i32, i32, i32
  }
  func.func @transform_1(%arg0: i32) -> (i32, i32) {
    %c0_i32 = arith.constant 0 : i32
    %c0_i32_0 = arith.constant 0 : i32
    %c0_i32_1 = arith.constant 0 : i32
    return %c0_i32, %c0_i32_0 : i32, i32
  }
  func.func @transform_2(%arg0: i32) -> (i32, i32) {
    %c0_i32 = arith.constant 0 : i32
    %c0_i32_0 = arith.constant 0 : i32
    %c0_i32_1 = arith.constant 0 : i32
    return %c0_i32, %c0_i32_0 : i32, i32
  }
  func.func @transform_3(%arg0: i32) -> (i32, i32) {
    %c0_i32 = arith.constant 0 : i32
    %c0_i32_0 = arith.constant 0 : i32
    %c0_i32_1 = arith.constant 0 : i32
    return %c0_i32, %c0_i32_0 : i32, i32
  }
  func.func @transform_4(%arg0: i32) -> (i32, i32) {
    %c0_i32 = arith.constant 0 : i32
    %c0_i32_0 = arith.constant 0 : i32
    %c0_i32_1 = arith.constant 0 : i32
    return %c0_i32, %c0_i32_0 : i32, i32
  }
  func.func @transform_5(%arg0: i32) -> (i32, i32) {
    %c0_i32 = arith.constant 0 : i32
    %c0_i32_0 = arith.constant 0 : i32
    %c0_i32_1 = arith.constant 0 : i32
    return %c0_i32, %c0_i32_0 : i32, i32
  }
  func.func @transform_6(%arg0: i32) -> (i32, i32) {
    %c0_i32 = arith.constant 0 : i32
    %c0_i32_0 = arith.constant 0 : i32
    %c0_i32_1 = arith.constant 0 : i32
    return %c0_i32, %c0_i32_0 : i32, i32
  }
  func.func @transform_7(%arg0: i32) -> (i32, i32) {
    %c0_i32 = arith.constant 0 : i32
    %c0_i32_0 = arith.constant 0 : i32
    %c0_i32_1 = arith.constant 0 : i32
    return %c0_i32, %c0_i32_0 : i32, i32
  }
  func.func @transform_8(%arg0: i32) -> (i32, i32, i32) {
    %c0_i32 = arith.constant 0 : i32
    %c0_i32_0 = arith.constant 0 : i32
    %c0_i32_1 = arith.constant 0 : i32
    return %arg0, %c0_i32, %c0_i32_0 : i32, i32, i32
  }
}

</mosaic_0001>

<llo_original>
// kernel: _lambda_.1
$region0: #{_lambda_.1}
  #allocation0 [shape = 'u32[]', space=smem, size = 0x4, offset = 0x4, fixed_abs, tag = 'smem constant byte address 0x4 - core index']
  #allocation1 [shape = 'u32[72,128]{1,0:T(1,128)}', space=vmem, size = 0x9000, scoped, tag = 'internal scratch']
  %s0 = inlined_call_operand.vmem [shape: f32[2,16,256], index: 0, kind: input, shape index: {}]
  %s1 = inlined_call_operand.vmem [shape: bf16[64,16], index: 1, kind: input, shape index: {}]
  %s2 = inlined_call_operand.vmem [shape: f32[64,1], index: 2, kind: input, shape index: {}]
  %s3 = inlined_call_operand.vmem [shape: f32[64,1], index: 3, kind: input, shape index: {}]
  %s4 = inlined_call_operand.vmem [shape: bf16[64,576], index: 4, kind: input, shape index: {}]
  %s5 = inlined_call_operand.vmem [shape: f32[64,1], index: 5, kind: input, shape index: {}]
  %s6 = inlined_call_operand.vmem [shape: f32[64,1], index: 6, kind: input, shape index: {}]
  %s7 = inlined_call_operand.vmem [shape: bf16[32,80], index: 7, kind: input, shape index: {}]
  %s8 = inlined_call_operand.vmem [shape: f32[2,32,256], index: 8, kind: output, shape index: {}]
  %s9 = sld [smem:[#allocation0]]
  $region65: #{_lambda_.1} parent=0
    _
  %s11 = ssub.s32 1, %s9
  %s12 = scalar_select 0, %s11, %s9
  loop: start=0, step=1, limit=4
  $region2: #{_lambda_.1} parent=0 // loop_pre_header
    _
  $region3: #{_lambda_.1} parent=0 // loop_header
    %s14 = sphi 0, %s18
    %p15 = scmp.ge.s32.totalorder %s14, 4
    %s24 = sphi 0, %s26
    %s27 = sphi 0, %s24
    %s28 = sphi 0, %s27
    %s44 = sphi 0, %s28
    %s48 = sphi 0, %s48
    %s50 = sphi 0, %s48
    %s51 = sphi 0, %s50
    %s65 = sphi 0, %s51
    %s69 = sphi 0, %s69
    %s71 = sphi 0, %s69
    %s72 = sphi 0, %s71
    %s86 = sphi 0, %s72
    %s90 = sphi 0, %s90
    %s92 = sphi 0, %s90
    %s93 = sphi 0, %s92
    %s107 = sphi 0, %s93
    %s111 = sphi 0, %s111
    %s113 = sphi 0, %s111
    %s114 = sphi 0, %s113
    %s128 = sphi 0, %s114
    %s132 = sphi 0, %s132
    %s134 = sphi 0, %s132
    %s135 = sphi 0, %s134
    %s149 = sphi 0, %s135
    %s153 = sphi 0, %s153
    %s155 = sphi 0, %s153
    %s156 = sphi 0, %s155
    %s170 = sphi 0, %s156
    %s174 = sphi 0, %s174
    %s176 = sphi 0, %s174
    %s177 = sphi 0, %s176
    %s191 = sphi 0, %s177
    %s197 = sphi 0, %s199
    %s200 = sphi 0, %s197
    %s201 = sphi 0, %s200
    %s217 = sphi 0, %s201
  $region4: #{_lambda_.1} parent=0 // loop_header_branch
    %17 = sbr.rel (%p15) target = $region8
  $region5: #{_lambda_.1} parent=0 // loop_body
    %s19 = ssub.s32 %s14, 1
    %s20 = ssub.s32 %s14, 2
    %s21 = sadd.s32 %s14, 1
    %s22 = ssub.s32 %s14, %s21
    %p23 = scmp.eq.s32.totalorder %s22, 0
    %s25 = sadd.s32 %s24, 1
    %s26 = scalar_select %p23, %s24, %s25
    %p29 = pneg %p23
    %p30 = scmp.eq.s32.totalorder %s14, 1
    %p31 = por %p29, %p30
    %p32 = scmp.ne.s32.totalorder %s24, %s27
    %p33 = scmp.eq.s32.totalorder %s14, 0
    %p34 = por %p32, %p33
    %p35 = scmp.ne.s32.totalorder %s24, %s27
    %p36 = scmp.eq.s32.totalorder %s19, 1
    %p37 = por %p35, %p36
    %p38 = scmp.ne.s32.totalorder %s27, %s28
    %p39 = scmp.eq.s32.totalorder %s19, 0
    %p40 = por %p38, %p39
    %p41 = scmp.ne.s32.totalorder %s27, %s28
    %p42 = scmp.eq.s32.totalorder %s20, 1
    %p43 = por %p41, %p42
    %p45 = scmp.ne.s32.totalorder %s28, %s44
    %p46 = scmp.eq.s32.totalorder %s20, 0
    %p47 = por %p45, %p46
    %s49 = sadd.s32 %s48, 1
    %p52 = scmp.eq.s32.totalorder %s14, 1
    %p53 = scmp.ne.s32.totalorder %s48, %s50
    %p54 = scmp.eq.s32.totalorder %s14, 0
    %p55 = por %p53, %p54
    %p56 = scmp.ne.s32.totalorder %s48, %s50
    %p57 = scmp.eq.s32.totalorder %s19, 1
    %p58 = por %p56, %p57
    %p59 = scmp.ne.s32.totalorder %s50, %s51
    %p60 = scmp.eq.s32.totalorder %s19, 0
    %p61 = por %p59, %p60
    %p62 = scmp.ne.s32.totalorder %s50, %s51
    %p63 = scmp.eq.s32.totalorder %s20, 1
    %p64 = por %p62, %p63
    %p66 = scmp.ne.s32.totalorder %s51, %s65
    %p67 = scmp.eq.s32.totalorder %s20, 0
    %p68 = por %p66, %p67
    %s70 = sadd.s32 %s69, 1
    %p73 = scmp.eq.s32.totalorder %s14, 1
    %p74 = scmp.ne.s32.totalorder %s69, %s71
    %p75 = scmp.eq.s32.totalorder %s14, 0
    %p76 = por %p74, %p75
    %p77 = scmp.ne.s32.totalorder %s69, %s71
    %p78 = scmp.eq.s32.totalorder %s19, 1
    %p79 = por %p77, %p78
    %p80 = scmp.ne.s32.totalorder %s71, %s72
    %p81 = scmp.eq.s32.totalorder %s19, 0
    %p82 = por %p80, %p81
    %p83 = scmp.ne.s32.totalorder %s71, %s72
    %p84 = scmp.eq.s32.totalorder %s20, 1
    %p85 = por %p83, %p84
    %p87 = scmp.ne.s32.totalorder %s72, %s86
    %p88 = scmp.eq.s32.totalorder %s20, 0
    %p89 = por %p87, %p88
    %s91 = sadd.s32 %s90, 1
    %p94 = scmp.eq.s32.totalorder %s14, 1
    %p95 = scmp.ne.s32.totalorder %s90, %s92
    %p96 = scmp.eq.s32.totalorder %s14, 0
    %p97 = por %p95, %p96
    %p98 = scmp.ne.s32.totalorder %s90, %s92
    %p99 = scmp.eq.s32.totalorder %s19, 1
    %p100 = por %p98, %p99
    %p101 = scmp.ne.s32.totalorder %s92, %s93
    %p102 = scmp.eq.s32.totalorder %s19, 0
    %p103 = por %p101, %p102
    %p104 = scmp.ne.s32.totalorder %s92, %s93
    %p105 = scmp.eq.s32.totalorder %s20, 1
    %p106 = por %p104, %p105
    %p108 = scmp.ne.s32.totalorder %s93, %s107
    %p109 = scmp.eq.s32.totalorder %s20, 0
    %p110 = por %p108, %p109
    %s112 = sadd.s32 %s111, 1
    %p115 = scmp.eq.s32.totalorder %s14, 1
    %p116 = scmp.ne.s32.totalorder %s111, %s113
    %p117 = scmp.eq.s32.totalorder %s14, 0
    %p118 = por %p116, %p117
    %p119 = scmp.ne.s32.totalorder %s111, %s113
    %p120 = scmp.eq.s32.totalorder %s19, 1
    %p121 = por %p119, %p120
    %p122 = scmp.ne.s32.totalorder %s113, %s114
    %p123 = scmp.eq.s32.totalorder %s19, 0
    %p124 = por %p122, %p123
    %p125 = scmp.ne.s32.totalorder %s113, %s114
    %p126 = scmp.eq.s32.totalorder %s20, 1
    %p127 = por %p125, %p126
    %p129 = scmp.ne.s32.totalorder %s114, %s128
    %p130 = scmp.eq.s32.totalorder %s20, 0
    %p131 = por %p129, %p130
    %s133 = sadd.s32 %s132, 1
    %p136 = scmp.eq.s32.totalorder %s14, 1
    %p137 = scmp.ne.s32.totalorder %s132, %s134
    %p138 = scmp.eq.s32.totalorder %s14, 0
    %p139 = por %p137, %p138
    %p140 = scmp.ne.s32.totalorder %s132, %s134
    %p141 = scmp.eq.s32.totalorder %s19, 1
    %p142 = por %p140, %p141
    %p143 = scmp.ne.s32.totalorder %s134, %s135
    %p144 = scmp.eq.s32.totalorder %s19, 0
    %p145 = por %p143, %p144
    %p146 = scmp.ne.s32.totalorder %s134, %s135
    %p147 = scmp.eq.s32.totalorder %s20, 1
    %p148 = por %p146, %p147
    %p150 = scmp.ne.s32.totalorder %s135, %s149
    %p151 = scmp.eq.s32.totalorder %s20, 0
    %p152 = por %p150, %p151
    %s154 = sadd.s32 %s153, 1
    %p157 = scmp.eq.s32.totalorder %s14, 1
    %p158 = scmp.ne.s32.totalorder %s153, %s155
    %p159 = scmp.eq.s32.totalorder %s14, 0
    %p160 = por %p158, %p159
    %p161 = scmp.ne.s32.totalorder %s153, %s155
    %p162 = scmp.eq.s32.totalorder %s19, 1
    %p163 = por %p161, %p162
    %p164 = scmp.ne.s32.totalorder %s155, %s156
    %p165 = scmp.eq.s32.totalorder %s19, 0
    %p166 = por %p164, %p165
    %p167 = scmp.ne.s32.totalorder %s155, %s156
    %p168 = scmp.eq.s32.totalorder %s20, 1
    %p169 = por %p167, %p168
    %p171 = scmp.ne.s32.totalorder %s156, %s170
    %p172 = scmp.eq.s32.totalorder %s20, 0
    %p173 = por %p171, %p172
    %s175 = sadd.s32 %s174, 1
    %p178 = scmp.eq.s32.totalorder %s14, 1
    %p179 = scmp.ne.s32.totalorder %s174, %s176
    %p180 = scmp.eq.s32.totalorder %s14, 0
    %p181 = por %p179, %p180
    %p182 = scmp.ne.s32.totalorder %s174, %s176
    %p183 = scmp.eq.s32.totalorder %s19, 1
    %p184 = por %p182, %p183
    %p185 = scmp.ne.s32.totalorder %s176, %s177
    %p186 = scmp.eq.s32.totalorder %s19, 0
    %p187 = por %p185, %p186
    %p188 = scmp.ne.s32.totalorder %s176, %s177
    %p189 = scmp.eq.s32.totalorder %s20, 1
    %p190 = por %p188, %p189
    %p192 = scmp.ne.s32.totalorder %s177, %s191
    %p193 = scmp.eq.s32.totalorder %s20, 0
    %p194 = por %p192, %p193
    %s195 = ssub.s32 %s14, %s21
    %p196 = scmp.eq.s32.totalorder %s195, 0
    %s198 = sadd.s32 %s197, 1
    %s199 = scalar_select %p196, %s197, %s198
    %p202 = pneg %p196
    %p203 = scmp.eq.s32.totalorder %s14, 1
    %p204 = por %p202, %p203
    %p205 = scmp.ne.s32.totalorder %s197, %s200
    %p206 = scmp.eq.s32.totalorder %s14, 0
    %p207 = por %p205, %p206
    %p208 = scmp.ne.s32.totalorder %s197, %s200
    %p209 = scmp.eq.s32.totalorder %s19, 1
    %p210 = por %p208, %p209
    %p211 = scmp.ne.s32.totalorder %s200, %s201
    %p212 = scmp.eq.s32.totalorder %s19, 0
    %p213 = por %p211, %p212
    %p214 = scmp.ne.s32.totalorder %s200, %s201
    %p215 = scmp.eq.s32.totalorder %s20, 1
    %p216 = por %p214, %p215
    %p218 = scmp.ne.s32.totalorder %s201, %s217
    %p219 = scmp.eq.s32.totalorder %s20, 0
    %p220 = por %p218, %p219
    %p221 = scmp.le.s32.totalorder 1, %s14
    %p222 = scmp.lt.s32.totalorder %s14, 3
    %p223 = pnand %p221, %p222
    %p224 = pneg %p223
    // Predicated region
    $region9: #{_lambda_.1} parent=5 // pred_check
      _
    $region10: #{_lambda_.1} parent=5 // pred_check_branch
      %226 = sbr.rel (%p223) target = $region12
    $region11: #{_lambda_.1} parent=5 // pred_region
      %s227 = ssub.s32 %s14, 1
      // Predicated region
      $region13: #{_lambda_.1} parent=11 // pred_check
        %p228 = pneg %p61
      $region14: #{_lambda_.1} parent=11 // pred_check_branch
        %230 = sbr.rel (%p228) target = $region16
      $region15: #{_lambda_.1} parent=11 // pred_region
        _
      $region16: #{_lambda_.1} parent=11 // pred_fallthru
        _
      // Predicated region
      $region17: #{_lambda_.1} parent=11 // pred_check
        %p231 = pneg %p82
      $region18: #{_lambda_.1} parent=11 // pred_check_branch
        %233 = sbr.rel (%p231) target = $region20
      $region19: #{_lambda_.1} parent=11 // pred_region
        _
      $region20: #{_lambda_.1} parent=11 // pred_fallthru
        _
      // Predicated region
      $region21: #{_lambda_.1} parent=11 // pred_check
        %p234 = pneg %p103
      $region22: #{_lambda_.1} parent=11 // pred_check_branch
        %236 = sbr.rel (%p234) target = $region24
      $region23: #{_lambda_.1} parent=11 // pred_region
        _
      $region24: #{_lambda_.1} parent=11 // pred_fallthru
        _
      // Predicated region
      $region25: #{_lambda_.1} parent=11 // pred_check
        %p237 = pneg %p124
      $region26: #{_lambda_.1} parent=11 // pred_check_branch
        %239 = sbr.rel (%p237) target = $region28
      $region27: #{_lambda_.1} parent=11 // pred_region
        _
      $region28: #{_lambda_.1} parent=11 // pred_fallthru
        _
      // Predicated region
      $region29: #{_lambda_.1} parent=11 // pred_check
        %p240 = pneg %p145
      $region30: #{_lambda_.1} parent=11 // pred_check_branch
        %242 = sbr.rel (%p240) target = $region32
      $region31: #{_lambda_.1} parent=11 // pred_region
        _
      $region32: #{_lambda_.1} parent=11 // pred_fallthru
        _
      // Predicated region
      $region33: #{_lambda_.1} parent=11 // pred_check
        %p243 = pneg %p166
      $region34: #{_lambda_.1} parent=11 // pred_check_branch
        %245 = sbr.rel (%p243) target = $region36
      $region35: #{_lambda_.1} parent=11 // pred_region
        _
      $region36: #{_lambda_.1} parent=11 // pred_fallthru
        _
      // Predicated region
      $region37: #{_lambda_.1} parent=11 // pred_check
        %p246 = pneg %p187
      $region38: #{_lambda_.1} parent=11 // pred_check_branch
        %248 = sbr.rel (%p246) target = $region40
      $region39: #{_lambda_.1} parent=11 // pred_region
        _
      $region40: #{_lambda_.1} parent=11 // pred_fallthru
        _
    $region12: #{_lambda_.1} parent=5 // pred_fallthru
      _
    %p249 = scmp.lt.s32.totalorder %s14, 2
    // Predicated region
    $region41: #{_lambda_.1} parent=5 // pred_check
      %p250 = pneg %p249
    $region42: #{_lambda_.1} parent=5 // pred_check_branch
      %252 = sbr.rel (%p250) target = $region44
    $region43: #{_lambda_.1} parent=5 // pred_region
      // Predicated region
      $region45: #{_lambda_.1} parent=43 // pred_check
        %p253 = pneg %p34
      $region46: #{_lambda_.1} parent=43 // pred_check_branch
        %255 = sbr.rel (%p253) target = $region48
      $region47: #{_lambda_.1} parent=43 // pred_region
        %p256 = scmp.lt.s32.totalorder %s14, 1
        %s257 = scalar_select %p256, %s14, 1
        %s258 = smul.addr %s257, 4
        %s259 = smul.addr %s258, 8
        %s260 = scalar_lea.vmem %s0, %s259
      $region48: #{_lambda_.1} parent=43 // pred_fallthru
        _
    $region44: #{_lambda_.1} parent=5 // pred_fallthru
      _
    %p261 = scmp.le.s32.totalorder 1, %s14
    %p262 = scmp.lt.s32.totalorder %s14, 3
    %p263 = pnand %p261, %p262
    %p264 = pneg %p263
    // Predicated region
    $region49: #{_lambda_.1} parent=5 // pred_check
      _
    $region50: #{_lambda_.1} parent=5 // pred_check_branch
      %266 = sbr.rel (%p263) target = $region52
    $region51: #{_lambda_.1} parent=5 // pred_region
      %s267 = ssub.s32 %s14, 1
      %p268 = scmp.lt.s32.totalorder %s19, 1
      %s269 = scalar_select %p268, %s19, 1
      %s270 = smul.addr %s269, 4
      %s271 = smul.addr %s270, 8
      %s272 = scalar_lea.vmem %s0, %s271
      %p273 = pneg %p40
      %p274 = pneg %p37
      %p275 = pneg %p61
      %p276 = pneg %p58
      %p277 = pneg %p82
      %p278 = pneg %p79
      %p279 = pneg %p103
      %p280 = pneg %p100
      %p281 = pneg %p124
      %p282 = pneg %p121
      %p283 = pneg %p145
      %p284 = pneg %p142
      %p285 = pneg %p166
      %p286 = pneg %p163
      %p287 = pneg %p187
      %p288 = pneg %p184
      %p289 = pneg %p213
      %p290 = pneg %p210
      %p291 = scmp.lt.s32.totalorder %s19, 1
      %s292 = scalar_select %p291, %s19, 1
      %s293 = smul.addr %s292, 8
      %s294 = smul.addr %s293, 8
      %s295 = scalar_lea.vmem %s8, %s294
      %p296 = scmp.lt.s32.totalorder %s19, 1
      %s297 = scalar_select %p296, %s19, 1
      %s298 = smul.addr %s297, 4
      %s299 = smul.addr %s298, 8
      %s300 = scalar_lea.vmem %s0, %s299
      %p301 = scmp.lt.s32.totalorder %s19, 1
      %s302 = scalar_select %p301, %s19, 1
      %s303 = smul.addr %s302, 8
      %s304 = smul.addr %s303, 8
      %s305 = scalar_lea.vmem %s8, %s304
      %v307 = vld [vmem:[%s300] sm:$0xff]
      %v308 = vld [vmem:[%s300 + $0x8] sm:$0xff]
      %v309 = vld [vmem:[%s300 + $0x10] sm:$0xff]
      %v310 = vld [vmem:[%s300 + $0x18] sm:$0xff]
      %v311 = vpack.c.bf16 %v308, %v307
      %v312 = vpack.c.bf16 %v310, %v309
      %v313 = vld [vmem:[%s1] sm:$0xf]
      %v314 = vld [vmem:[%s1 + $0x4] sm:$0xf]
      %v315 = vld [vmem:[%s1 + $0x8] sm:$0xf]
      %v316 = vld [vmem:[%s1 + $0xc] sm:$0xf]
      %v317 = vld [vmem:[%s1 + $0x10] sm:$0xf]
      %v318 = vld [vmem:[%s1 + $0x14] sm:$0xf]
      %v319 = vld [vmem:[%s1 + $0x18] sm:$0xf]
      %v320 = vld [vmem:[%s1 + $0x1c] sm:$0xf]
      %v329 = vunpack.c.l.b16 %v313
      %v330 = vunpack.c.l.b16 %v314
      %v331 = vunpack.c.l.b16 %v315
      %v332 = vunpack.c.l.b16 %v316
      %v333 = vunpack.c.l.b16 %v317
      %v334 = vunpack.c.l.b16 %v318
      %v335 = vunpack.c.l.b16 %v319
      %v336 = vunpack.c.l.b16 %v320
      %v337 = vpack.c.b16 %v330, %v329
      %v338 = vpack.c.b16 %v332, %v331
      %v339 = vpack.c.b16 %v334, %v333
      %v340 = vpack.c.b16 %v336, %v335
      %v343 = vunpack.c.l.b16 %v311
      %v344 = vunpack.c.h.b16 %v311
      %v345 = vunpack.c.l.b16 %v312
      %v346 = vunpack.c.h.b16 %v312
      %v347 = vpack.c.b16 %v345, %v343
      %v348 = vpack.c.b16 %v346, %v344
      %vm351 = vcmask 130048
      %v353 = vsel %vm351, %v337, 0
      %v356 = vsel %vm351, %v338, 0
      %v359 = vsel %vm351, %v339, 0
      %v362 = vsel %vm351, %v340, 0
      %364 = vmatpush.bf16.msra.mxu0 0
      %365 = vmatpush.bf16.msra.mxu0 0
      %366 = vmatpush.bf16.msra.mxu0 0
      %367 = vmatpush.bf16.msra.mxu0 0
      %368 = vmatpush.bf16.msra.mxu0 0
      %369 = vmatpush.bf16.msra.mxu0 0
      %370 = vmatpush.bf16.msra.mxu0 0
      %371 = vmatpush.bf16.msra.mxu0 %v347
      %372 = vmatmul.bf16.gmra.mxu0 %v353
      %v373 = vpop.f32.mrf.mxu0
      %v374 = vadd.f32 0.0, %v373
      %v375 = vpop.f32.mrf.mxu0
      %v376 = vadd.f32 0.0, %v375
      %377 = vmatmul.bf16.gmra.mxu0 %v356
      %v378 = vpop.f32.mrf.mxu0
      %v379 = vadd.f32 0.0, %v378
      %v380 = vpop.f32.mrf.mxu0
      %v381 = vadd.f32 0.0, %v380
      %382 = vmatmul.bf16.gmra.mxu0 %v359
      %v383 = vpop.f32.mrf.mxu0
      %v384 = vadd.f32 0.0, %v383
      %v385 = vpop.f32.mrf.mxu0
      %v386 = vadd.f32 0.0, %v385
      %387 = vmatmul.bf16.gmra.mxu0 %v362
      %v388 = vpop.f32.mrf.mxu0
      %v389 = vadd.f32 0.0, %v388
      %v390 = vpop.f32.mrf.mxu0
      %v391 = vadd.f32 0.0, %v390
      %392 = vdwg.mxu0
      %393 = vmatpush.bf16.msra.mxu0 0
      %394 = vmatpush.bf16.msra.mxu0 0
      %395 = vmatpush.bf16.msra.mxu0 0
      %396 = vmatpush.bf16.msra.mxu0 0
      %397 = vmatpush.bf16.msra.mxu0 0
      %398 = vmatpush.bf16.msra.mxu0 0
      %399 = vmatpush.bf16.msra.mxu0 0
      %400 = vmatpush.bf16.msra.mxu0 %v348
      %401 = vmatmul.bf16.gmra.mxu0 %v353
      %v402 = vpop.f32.mrf.mxu0
      %v403 = vadd.f32 0.0, %v402
      %v404 = vpop.f32.mrf.mxu0
      %v405 = vadd.f32 0.0, %v404
      %406 = vmatmul.bf16.gmra.mxu0 %v356
      %v407 = vpop.f32.mrf.mxu0
      %v408 = vadd.f32 0.0, %v407
      %v409 = vpop.f32.mrf.mxu0
      %v410 = vadd.f32 0.0, %v409
      %411 = vmatmul.bf16.gmra.mxu0 %v359
      %v412 = vpop.f32.mrf.mxu0
      %v413 = vadd.f32 0.0, %v412
      %v414 = vpop.f32.mrf.mxu0
      %v415 = vadd.f32 0.0, %v414
      %416 = vmatmul.bf16.gmra.mxu0 %v362
      %v417 = vpop.f32.mrf.mxu0
      %v418 = vadd.f32 0.0, %v417
      %v419 = vpop.f32.mrf.mxu0
      %v420 = vadd.f32 0.0, %v419
      %421 = vdwg.mxu0
      %v422 = vld [vmem:[%s2] sm:$0xff]
      %v423 = vld [vmem:[%s2 + $0x8] sm:$0xff]
      %v424 = vld [vmem:[%s2 + $0x10] sm:$0xff]
      %v425 = vld [vmem:[%s2 + $0x18] sm:$0xff]
      %v426 = vld [vmem:[%s2 + $0x20] sm:$0xff]
      %v427 = vld [vmem:[%s2 + $0x28] sm:$0xff]
      %v428 = vld [vmem:[%s2 + $0x30] sm:$0xff]
      %v429 = vld [vmem:[%s2 + $0x38] sm:$0xff]
      %431 = vset.pattern.permute.xlu0 0
      %432 = vperm.xlu0 %431, %v422
      %v433 = vpop.permute.xlu0 %432
      %436 = vset.pattern.permute.xlu0 0
      %437 = vperm.xlu0 %436, %v423
      %v438 = vpop.permute.xlu0 %437
      %441 = vset.pattern.permute.xlu0 0
      %442 = vperm.xlu0 %441, %v424
      %v443 = vpop.permute.xlu0 %442
      %446 = vset.pattern.permute.xlu0 0
      %447 = vperm.xlu0 %446, %v425
      %v448 = vpop.permute.xlu0 %447
      %451 = vset.pattern.permute.xlu0 0
      %452 = vperm.xlu0 %451, %v426
      %v453 = vpop.permute.xlu0 %452
      %456 = vset.pattern.permute.xlu0 0
      %457 = vperm.xlu0 %456, %v427
      %v458 = vpop.permute.xlu0 %457
      %461 = vset.pattern.permute.xlu0 0
      %462 = vperm.xlu0 %461, %v428
      %v463 = vpop.permute.xlu0 %462
      %466 = vset.pattern.permute.xlu0 0
      %467 = vperm.xlu0 %466, %v429
      %v468 = vpop.permute.xlu0 %467
      %v470 = vmul.f32 %v374, %v433
      %v471 = vmul.f32 %v403, %v433
      %v472 = vmul.f32 %v376, %v438
      %v473 = vmul.f32 %v405, %v438
      %v474 = vmul.f32 %v379, %v443
      %v475 = vmul.f32 %v408, %v443
      %v476 = vmul.f32 %v381, %v448
      %v477 = vmul.f32 %v410, %v448
      %v478 = vmul.f32 %v384, %v453
      %v479 = vmul.f32 %v413, %v453
      %v480 = vmul.f32 %v386, %v458
      %v481 = vmul.f32 %v415, %v458
      %v482 = vmul.f32 %v389, %v463
      %v483 = vmul.f32 %v418, %v463
      %v484 = vmul.f32 %v391, %v468
      %v485 = vmul.f32 %v420, %v468
      %v486 = vld [vmem:[%s3] sm:$0xff]
      %v487 = vld [vmem:[%s3 + $0x8] sm:$0xff]
      %v488 = vld [vmem:[%s3 + $0x10] sm:$0xff]
      %v489 = vld [vmem:[%s3 + $0x18] sm:$0xff]
      %v490 = vld [vmem:[%s3 + $0x20] sm:$0xff]
      %v491 = vld [vmem:[%s3 + $0x28] sm:$0xff]
      %v492 = vld [vmem:[%s3 + $0x30] sm:$0xff]
      %v493 = vld [vmem:[%s3 + $0x38] sm:$0xff]
      %495 = vset.pattern.permute.xlu0 0
      %496 = vperm.xlu0 %495, %v486
      %v497 = vpop.permute.xlu0 %496
      %500 = vset.pattern.permute.xlu0 0
      %501 = vperm.xlu0 %500, %v487
      %v502 = vpop.permute.xlu0 %501
      %505 = vset.pattern.permute.xlu0 0
      %506 = vperm.xlu0 %505, %v488
      %v507 = vpop.permute.xlu0 %506
      %510 = vset.pattern.permute.xlu0 0
      %511 = vperm.xlu0 %510, %v489
      %v512 = vpop.permute.xlu0 %511
      %515 = vset.pattern.permute.xlu0 0
      %516 = vperm.xlu0 %515, %v490
      %v517 = vpop.permute.xlu0 %516
      %520 = vset.pattern.permute.xlu0 0
      %521 = vperm.xlu0 %520, %v491
      %v522 = vpop.permute.xlu0 %521
      %525 = vset.pattern.permute.xlu0 0
      %526 = vperm.xlu0 %525, %v492
      %v527 = vpop.permute.xlu0 %526
      %530 = vset.pattern.permute.xlu0 0
      %531 = vperm.xlu0 %530, %v493
      %v532 = vpop.permute.xlu0 %531
      %v534 = vadd.f32 %v470, %v497
      %v535 = vadd.f32 %v471, %v497
      %v536 = vadd.f32 %v472, %v502
      %v537 = vadd.f32 %v473, %v502
      %v538 = vadd.f32 %v474, %v507
      %v539 = vadd.f32 %v475, %v507
      %v540 = vadd.f32 %v476, %v512
      %v541 = vadd.f32 %v477, %v512
      %v542 = vadd.f32 %v478, %v517
      %v543 = vadd.f32 %v479, %v517
      %v544 = vadd.f32 %v480, %v522
      %v545 = vadd.f32 %v481, %v522
      %v546 = vadd.f32 %v482, %v527
      %v547 = vadd.f32 %v483, %v527
      %v548 = vadd.f32 %v484, %v532
      %v549 = vadd.f32 %v485, %v532
      %v550 = vmax.f32 %v534, 0.0
      %v551 = vmax.f32 %v535, 0.0
      %v552 = vmax.f32 %v536, 0.0
      %v553 = vmax.f32 %v537, 0.0
      %v554 = vmax.f32 %v538, 0.0
      %v555 = vmax.f32 %v539, 0.0
      %v556 = vmax.f32 %v540, 0.0
      %v557 = vmax.f32 %v541, 0.0
      %v558 = vmax.f32 %v542, 0.0
      %v559 = vmax.f32 %v543, 0.0
      %v560 = vmax.f32 %v544, 0.0
      %v561 = vmax.f32 %v545, 0.0
      %v562 = vmax.f32 %v546, 0.0
      %v563 = vmax.f32 %v547, 0.0
      %v564 = vmax.f32 %v548, 0.0
      %v565 = vmax.f32 %v549, 0.0
      %582 = vrot.lane.b32.xlu0 %v550, 17
      %v583 = vpop.permute.xlu0 %582
      %584 = vrot.lane.b32.xlu0 %v551, 17
      %v585 = vpop.permute.xlu0 %584
      %586 = vrot.lane.b32.xlu0 %v552, 17
      %v587 = vpop.permute.xlu0 %586
      %588 = vrot.lane.b32.xlu0 %v553, 17
      %v589 = vpop.permute.xlu0 %588
      %590 = vrot.lane.b32.xlu0 %v554, 17
      %v591 = vpop.permute.xlu0 %590
      %592 = vrot.lane.b32.xlu0 %v555, 17
      %v593 = vpop.permute.xlu0 %592
      %594 = vrot.lane.b32.xlu0 %v556, 17
      %v595 = vpop.permute.xlu0 %594
      %596 = vrot.lane.b32.xlu0 %v557, 17
      %v597 = vpop.permute.xlu0 %596
      %598 = vrot.lane.b32.xlu0 %v558, 17
      %v599 = vpop.permute.xlu0 %598
      %600 = vrot.lane.b32.xlu0 %v559, 17
      %v601 = vpop.permute.xlu0 %600
      %602 = vrot.lane.b32.xlu0 %v560, 17
      %v603 = vpop.permute.xlu0 %602
      %604 = vrot.lane.b32.xlu0 %v561, 17
      %v605 = vpop.permute.xlu0 %604
      %606 = vrot.lane.b32.xlu0 %v562, 17
      %v607 = vpop.permute.xlu0 %606
      %608 = vrot.lane.b32.xlu0 %v563, 17
      %v609 = vpop.permute.xlu0 %608
      %610 = vrot.lane.b32.xlu0 %v564, 17
      %v611 = vpop.permute.xlu0 %610
      %612 = vrot.lane.b32.xlu0 %v565, 17
      %v613 = vpop.permute.xlu0 %612
      %vm614 = vcmask 138240
      %v615 = vsel %vm614, %v583, %v585
      %v616 = vsel %vm614, %v587, %v589
      %v617 = vsel %vm614, %v591, %v593
      %v618 = vsel %vm614, %v595, %v597
      %v619 = vsel %vm614, %v599, %v601
      %v620 = vsel %vm614, %v603, %v605
      %v621 = vsel %vm614, %v607, %v609
      %v622 = vsel %vm614, %v611, %v613
      %v647 = vsel %vm614, 0.0, %v583
      %v648 = vsel %vm614, 0.0, %v587
      %v649 = vsel %vm614, 0.0, %v591
      %v650 = vsel %vm614, 0.0, %v595
      %v651 = vsel %vm614, 0.0, %v599
      %v652 = vsel %vm614, 0.0, %v603
      %v653 = vsel %vm614, 0.0, %v607
      %v654 = vsel %vm614, 0.0, %v611
      %v655 = vsel %vm614, %v585, 0.0
      %v656 = vsel %vm614, %v589, 0.0
      %v657 = vsel %vm614, %v593, 0.0
      %v658 = vsel %vm614, %v597, 0.0
      %v659 = vsel %vm614, %v601, 0.0
      %v660 = vsel %vm614, %v605, 0.0
      %v661 = vsel %vm614, %v609, 0.0
      %v662 = vsel %vm614, %v613, 0.0
      %v663 = vlaneseq
      %v664 = vand.u32 %v663, 127
      %v665 = vadd.s32 %v664, 128
      %vm666 = vcmp.lt.s32.totalorder %v664, 0
      %v667 = vsub.s32 0, %v664
      %v668 = vsel %vm666, %v667, %v664
      %v669 = vshrl.u32 %v668, 4
      %v670 = vand.u32 %v668, 15
      %v671 = vsub.s32 0, %v670
      %v672 = vsel %vm666, %v671, %v670
      %vm673 = vcmp.lt.s32.totalorder %v665, 0
      %v674 = vsub.s32 0, %v665
      %v675 = vsel %vm673, %v674, %v665
      %v676 = vshrl.u32 %v675, 4
      %v677 = vand.u32 %v675, 15
      %v678 = vsub.s32 0, %v677
      %v679 = vsel %vm673, %v678, %v677
      %vm680 = vcmp.ne.s32.totalorder %v672, 0
      %vm681 = vcmp.ne.s32.totalorder %v679, 0
      %vm682 = vcmp.lt.s32.totalorder %v672, 0
      %vm683 = vcmp.lt.s32.totalorder %v679, 0
      %vm684 = vmand %vm682, %vm680
      %vm685 = vmand %vm683, %vm681
      %v686 = vadd.s32 %v672, 16
      %v687 = vadd.s32 %v679, 16
      %v688 = vsel %vm684, %v686, %v672
      %v689 = vsel %vm685, %v687, %v679
      %vm690 = vcmp.ge.s32.totalorder %v688, 1
      %vm691 = vcmp.ge.s32.totalorder %v689, 1
      %vm692 = vcmp.le.s32.totalorder %v688, 14
      %vm693 = vcmp.le.s32.totalorder %v689, 14
      %v694 = vsel %vm690, %v647, 0.0
      %v695 = vsel %vm691, %v615, 0.0
      %v696 = vsel %vm690, %v648, 0.0
      %v697 = vsel %vm691, %v616, 0.0
      %v698 = vsel %vm690, %v649, 0.0
      %v699 = vsel %vm691, %v617, 0.0
      %v700 = vsel %vm690, %v650, 0.0
      %v701 = vsel %vm691, %v618, 0.0
      %v702 = vsel %vm690, %v651, 0.0
      %v703 = vsel %vm691, %v619, 0.0
      %v704 = vsel %vm690, %v652, 0.0
      %v705 = vsel %vm691, %v620, 0.0
      %v706 = vsel %vm690, %v653, 0.0
      %v707 = vsel %vm691, %v621, 0.0
      %v708 = vsel %vm690, %v654, 0.0
      %v709 = vsel %vm691, %v622, 0.0
      %v710 = vpack.c.bf16 %v695, %v694
      %v711 = vpack.c.bf16 %v697, %v696
      %v712 = vpack.c.bf16 %v699, %v698
      %v713 = vpack.c.bf16 %v701, %v700
      %v714 = vpack.c.bf16 %v703, %v702
      %v715 = vpack.c.bf16 %v705, %v704
      %v716 = vpack.c.bf16 %v707, %v706
      %v717 = vpack.c.bf16 %v709, %v708
      %v718 = vpack.c.bf16 %v615, %v647
      %v719 = vpack.c.bf16 %v655, %v655
      %v720 = vpack.c.bf16 %v616, %v648
      %v721 = vpack.c.bf16 %v656, %v656
      %v722 = vpack.c.bf16 %v617, %v649
      %v723 = vpack.c.bf16 %v657, %v657
      %v724 = vpack.c.bf16 %v618, %v650
      %v725 = vpack.c.bf16 %v658, %v658
      %v726 = vpack.c.bf16 %v619, %v651
      %v727 = vpack.c.bf16 %v659, %v659
      %v728 = vpack.c.bf16 %v620, %v652
      %v729 = vpack.c.bf16 %v660, %v660
      %v730 = vpack.c.bf16 %v621, %v653
      %v731 = vpack.c.bf16 %v661, %v661
      %v732 = vpack.c.bf16 %v622, %v654
      %v733 = vpack.c.bf16 %v662, %v662
      %750 = vrot.lane.b32.xlu0 %v647, 126
      %v751 = vpop.permute.xlu0 %750
      %752 = vrot.lane.b32.xlu0 %v615, 126
      %v753 = vpop.permute.xlu0 %752
      %754 = vrot.lane.b32.xlu0 %v655, 126
      %v755 = vpop.permute.xlu0 %754
      %756 = vrot.lane.b32.xlu0 %v648, 126
      %v757 = vpop.permute.xlu0 %756
      %758 = vrot.lane.b32.xlu0 %v616, 126
      %v759 = vpop.permute.xlu0 %758
      %760 = vrot.lane.b32.xlu0 %v656, 126
      %v761 = vpop.permute.xlu0 %760
      %762 = vrot.lane.b32.xlu0 %v649, 126
      %v763 = vpop.permute.xlu0 %762
      %764 = vrot.lane.b32.xlu0 %v617, 126
      %v765 = vpop.permute.xlu0 %764
      %766 = vrot.lane.b32.xlu0 %v657, 126
      %v767 = vpop.permute.xlu0 %766
      %768 = vrot.lane.b32.xlu0 %v650, 126
      %v769 = vpop.permute.xlu0 %768
      %770 = vrot.lane.b32.xlu0 %v618, 126
      %v771 = vpop.permute.xlu0 %770
      %772 = vrot.lane.b32.xlu0 %v658, 126
      %v773 = vpop.permute.xlu0 %772
      %774 = vrot.lane.b32.xlu0 %v651, 126
      %v775 = vpop.permute.xlu0 %774
      %776 = vrot.lane.b32.xlu0 %v619, 126
      %v777 = vpop.permute.xlu0 %776
      %778 = vrot.lane.b32.xlu0 %v659, 126
      %v779 = vpop.permute.xlu0 %778
      %780 = vrot.lane.b32.xlu0 %v652, 126
      %v781 = vpop.permute.xlu0 %780
      %782 = vrot.lane.b32.xlu0 %v620, 126
      %v783 = vpop.permute.xlu0 %782
      %784 = vrot.lane.b32.xlu0 %v660, 126
      %v785 = vpop.permute.xlu0 %784
      %786 = vrot.lane.b32.xlu0 %v653, 126
      %v787 = vpop.permute.xlu0 %786
      %788 = vrot.lane.b32.xlu0 %v621, 126
      %v789 = vpop.permute.xlu0 %788
      %790 = vrot.lane.b32.xlu0 %v661, 126
      %v791 = vpop.permute.xlu0 %790
      %792 = vrot.lane.b32.xlu0 %v654, 126
      %v793 = vpop.permute.xlu0 %792
      %794 = vrot.lane.b32.xlu0 %v622, 126
      %v795 = vpop.permute.xlu0 %794
      %796 = vrot.lane.b32.xlu0 %v662, 126
      %v797 = vpop.permute.xlu0 %796
      %vm798 = vcmask 1031168
      %v799 = vsel %vm798, %v751, %v753
      %v800 = vsel %vm798, %v753, %v755
      %v801 = vsel %vm798, %v757, %v759
      %v802 = vsel %vm798, %v759, %v761
      %v803 = vsel %vm798, %v763, %v765
      %v804 = vsel %vm798, %v765, %v767
      %v805 = vsel %vm798, %v769, %v771
      %v806 = vsel %vm798, %v771, %v773
      %v807 = vsel %vm798, %v775, %v777
      %v808 = vsel %vm798, %v777, %v779
      %v809 = vsel %vm798, %v781, %v783
      %v810 = vsel %vm798, %v783, %v785
      %v811 = vsel %vm798, %v787, %v789
      %v812 = vsel %vm798, %v789, %v791
      %v813 = vsel %vm798, %v793, %v795
      %v814 = vsel %vm798, %v795, %v797
      %v831 = vsel %vm692, %v799, 0.0
      %v832 = vsel %vm693, %v800, 0.0
      %v833 = vsel %vm692, %v801, 0.0
      %v834 = vsel %vm693, %v802, 0.0
      %v835 = vsel %vm692, %v803, 0.0
      %v836 = vsel %vm693, %v804, 0.0
      %v837 = vsel %vm692, %v805, 0.0
      %v838 = vsel %vm693, %v806, 0.0
      %v839 = vsel %vm692, %v807, 0.0
      %v840 = vsel %vm693, %v808, 0.0
      %v841 = vsel %vm692, %v809, 0.0
      %v842 = vsel %vm693, %v810, 0.0
      %v843 = vsel %vm692, %v811, 0.0
      %v844 = vsel %vm693, %v812, 0.0
      %v845 = vsel %vm692, %v813, 0.0
      %v846 = vsel %vm693, %v814, 0.0
      %v847 = vpack.c.bf16 %v832, %v831
      %v848 = vpack.c.bf16 %v834, %v833
      %v849 = vpack.c.bf16 %v836, %v835
      %v850 = vpack.c.bf16 %v838, %v837
      %v851 = vpack.c.bf16 %v840, %v839
      %v852 = vpack.c.bf16 %v842, %v841
      %v853 = vpack.c.bf16 %v844, %v843
      %v854 = vpack.c.bf16 %v846, %v845
      %855 = vrot.lane.b32.xlu0 %v647, 112
      %v856 = vpop.permute.xlu0 %855
      %857 = vrot.lane.b32.xlu0 %v615, 112
      %v858 = vpop.permute.xlu0 %857
      %859 = vrot.lane.b32.xlu0 %v655, 112
      %v860 = vpop.permute.xlu0 %859
      %861 = vrot.lane.b32.xlu0 %v648, 112
      %v862 = vpop.permute.xlu0 %861
      %863 = vrot.lane.b32.xlu0 %v616, 112
      %v864 = vpop.permute.xlu0 %863
      %865 = vrot.lane.b32.xlu0 %v656, 112
      %v866 = vpop.permute.xlu0 %865
      %867 = vrot.lane.b32.xlu0 %v649, 112
      %v868 = vpop.permute.xlu0 %867
      %869 = vrot.lane.b32.xlu0 %v617, 112
      %v870 = vpop.permute.xlu0 %869
      %871 = vrot.lane.b32.xlu0 %v657, 112
      %v872 = vpop.permute.xlu0 %871
      %873 = vrot.lane.b32.xlu0 %v650, 112
      %v874 = vpop.permute.xlu0 %873
      %875 = vrot.lane.b32.xlu0 %v618, 112
      %v876 = vpop.permute.xlu0 %875
      %877 = vrot.lane.b32.xlu0 %v658, 112
      %v878 = vpop.permute.xlu0 %877
      %879 = vrot.lane.b32.xlu0 %v651, 112
      %v880 = vpop.permute.xlu0 %879
      %881 = vrot.lane.b32.xlu0 %v619, 112
      %v882 = vpop.permute.xlu0 %881
      %883 = vrot.lane.b32.xlu0 %v659, 112
      %v884 = vpop.permute.xlu0 %883
      %885 = vrot.lane.b32.xlu0 %v652, 112
      %v886 = vpop.permute.xlu0 %885
      %887 = vrot.lane.b32.xlu0 %v620, 112
      %v888 = vpop.permute.xlu0 %887
      %889 = vrot.lane.b32.xlu0 %v660, 112
      %v890 = vpop.permute.xlu0 %889
      %891 = vrot.lane.b32.xlu0 %v653, 112
      %v892 = vpop.permute.xlu0 %891
      %893 = vrot.lane.b32.xlu0 %v621, 112
      %v894 = vpop.permute.xlu0 %893
      %895 = vrot.lane.b32.xlu0 %v661, 112
      %v896 = vpop.permute.xlu0 %895
      %897 = vrot.lane.b32.xlu0 %v654, 112
      %v898 = vpop.permute.xlu0 %897
      %899 = vrot.lane.b32.xlu0 %v622, 112
      %v900 = vpop.permute.xlu0 %899
      %901 = vrot.lane.b32.xlu0 %v662, 112
      %v902 = vpop.permute.xlu0 %901
      %vm903 = vcmask 916480
      %v904 = vsel %vm903, %v856, %v858
      %v905 = vsel %vm903, %v858, %v860
      %v906 = vsel %vm903, %v862, %v864
      %v907 = vsel %vm903, %v864, %v866
      %v908 = vsel %vm903, %v868, %v870
      %v909 = vsel %vm903, %v870, %v872
      %v910 = vsel %vm903, %v874, %v876
      %v911 = vsel %vm903, %v876, %v878
      %v912 = vsel %vm903, %v880, %v882
      %v913 = vsel %vm903, %v882, %v884
      %v914 = vsel %vm903, %v886, %v888
      %v915 = vsel %vm903, %v888, %v890
      %v916 = vsel %vm903, %v892, %v894
      %v917 = vsel %vm903, %v894, %v896
      %v918 = vsel %vm903, %v898, %v900
      %v919 = vsel %vm903, %v900, %v902
      %v936 = vsel %vm690, %v904, 0.0
      %v937 = vsel %vm691, %v905, 0.0
      %v938 = vsel %vm690, %v906, 0.0
      %v939 = vsel %vm691, %v907, 0.0
      %v940 = vsel %vm690, %v908, 0.0
      %v941 = vsel %vm691, %v909, 0.0
      %v942 = vsel %vm690, %v910, 0.0
      %v943 = vsel %vm691, %v911, 0.0
      %v944 = vsel %vm690, %v912, 0.0
      %v945 = vsel %vm691, %v913, 0.0
      %v946 = vsel %vm690, %v914, 0.0
      %v947 = vsel %vm691, %v915, 0.0
      %v948 = vsel %vm690, %v916, 0.0
      %v949 = vsel %vm691, %v917, 0.0
      %v950 = vsel %vm690, %v918, 0.0
      %v951 = vsel %vm691, %v919, 0.0
      %v952 = vpack.c.bf16 %v937, %v936
      %v953 = vpack.c.bf16 %v939, %v938
      %v954 = vpack.c.bf16 %v941, %v940
      %v955 = vpack.c.bf16 %v943, %v942
      %v956 = vpack.c.bf16 %v945, %v944
      %v957 = vpack.c.bf16 %v947, %v946
      %v958 = vpack.c.bf16 %v949, %v948
      %v959 = vpack.c.bf16 %v951, %v950
      %960 = vrot.lane.b32.xlu0 %v647, 110
      %v961 = vpop.permute.xlu0 %960
      %962 = vrot.lane.b32.xlu0 %v615, 110
      %v963 = vpop.permute.xlu0 %962
      %964 = vrot.lane.b32.xlu0 %v655, 110
      %v965 = vpop.permute.xlu0 %964
      %966 = vrot.lane.b32.xlu0 %v648, 110
      %v967 = vpop.permute.xlu0 %966
      %968 = vrot.lane.b32.xlu0 %v616, 110
      %v969 = vpop.permute.xlu0 %968
      %970 = vrot.lane.b32.xlu0 %v656, 110
      %v971 = vpop.permute.xlu0 %970
      %972 = vrot.lane.b32.xlu0 %v649, 110
      %v973 = vpop.permute.xlu0 %972
      %974 = vrot.lane.b32.xlu0 %v617, 110
      %v975 = vpop.permute.xlu0 %974
      %976 = vrot.lane.b32.xlu0 %v657, 110
      %v977 = vpop.permute.xlu0 %976
      %978 = vrot.lane.b32.xlu0 %v650, 110
      %v979 = vpop.permute.xlu0 %978
      %980 = vrot.lane.b32.xlu0 %v618, 110
      %v981 = vpop.permute.xlu0 %980
      %982 = vrot.lane.b32.xlu0 %v658, 110
      %v983 = vpop.permute.xlu0 %982
      %984 = vrot.lane.b32.xlu0 %v651, 110
      %v985 = vpop.permute.xlu0 %984
      %986 = vrot.lane.b32.xlu0 %v619, 110
      %v987 = vpop.permute.xlu0 %986
      %988 = vrot.lane.b32.xlu0 %v659, 110
      %v989 = vpop.permute.xlu0 %988
      %990 = vrot.lane.b32.xlu0 %v652, 110
      %v991 = vpop.permute.xlu0 %990
      %992 = vrot.lane.b32.xlu0 %v620, 110
      %v993 = vpop.permute.xlu0 %992
      %994 = vrot.lane.b32.xlu0 %v660, 110
      %v995 = vpop.permute.xlu0 %994
      %996 = vrot.lane.b32.xlu0 %v653, 110
      %v997 = vpop.permute.xlu0 %996
      %998 = vrot.lane.b32.xlu0 %v621, 110
      %v999 = vpop.permute.xlu0 %998
      %1000 = vrot.lane.b32.xlu0 %v661, 110
      %v1001 = vpop.permute.xlu0 %1000
      %1002 = vrot.lane.b32.xlu0 %v654, 110
      %v1003 = vpop.permute.xlu0 %1002
      %1004 = vrot.lane.b32.xlu0 %v622, 110
      %v1005 = vpop.permute.xlu0 %1004
      %1006 = vrot.lane.b32.xlu0 %v662, 110
      %v1007 = vpop.permute.xlu0 %1006
      %vm1008 = vcmask 900096
      %v1009 = vsel %vm1008, %v961, %v963
      %v1010 = vsel %vm1008, %v963, %v965
      %v1011 = vsel %vm1008, %v967, %v969
      %v1012 = vsel %vm1008, %v969, %v971
      %v1013 = vsel %vm1008, %v973, %v975
      %v1014 = vsel %vm1008, %v975, %v977
      %v1015 = vsel %vm1008, %v979, %v981
      %v1016 = vsel %vm1008, %v981, %v983
      %v1017 = vsel %vm1008, %v985, %v987
      %v1018 = vsel %vm1008, %v987, %v989
      %v1019 = vsel %vm1008, %v991, %v993
      %v1020 = vsel %vm1008, %v993, %v995
      %v1021 = vsel %vm1008, %v997, %v999
      %v1022 = vsel %vm1008, %v999, %v1001
      %v1023 = vsel %vm1008, %v1003, %v1005
      %v1024 = vsel %vm1008, %v1005, %v1007
      %v1041 = vsel %vm692, %v1009, 0.0
      %v1042 = vsel %vm693, %v1010, 0.0
      %v1043 = vsel %vm692, %v1011, 0.0
      %v1044 = vsel %vm693, %v1012, 0.0
      %v1045 = vsel %vm692, %v1013, 0.0
      %v1046 = vsel %vm693, %v1014, 0.0
      %v1047 = vsel %vm692, %v1015, 0.0
      %v1048 = vsel %vm693, %v1016, 0.0
      %v1049 = vsel %vm692, %v1017, 0.0
      %v1050 = vsel %vm693, %v1018, 0.0
      %v1051 = vsel %vm692, %v1019, 0.0
      %v1052 = vsel %vm693, %v1020, 0.0
      %v1053 = vsel %vm692, %v1021, 0.0
      %v1054 = vsel %vm693, %v1022, 0.0
      %v1055 = vsel %vm692, %v1023, 0.0
      %v1056 = vsel %vm693, %v1024, 0.0
      %v1057 = vpack.c.bf16 %v1042, %v1041
      %v1058 = vpack.c.bf16 %v1044, %v1043
      %v1059 = vpack.c.bf16 %v1046, %v1045
      %v1060 = vpack.c.bf16 %v1048, %v1047
      %v1061 = vpack.c.bf16 %v1050, %v1049
      %v1062 = vpack.c.bf16 %v1052, %v1051
      %v1063 = vpack.c.bf16 %v1054, %v1053
      %v1064 = vpack.c.bf16 %v1056, %v1055
      %1065 = vrot.lane.b32.xlu0 %v647, 96
      %v1066 = vpop.permute.xlu0 %1065
      %1067 = vrot.lane.b32.xlu0 %v615, 96
      %v1068 = vpop.permute.xlu0 %1067
      %1069 = vrot.lane.b32.xlu0 %v655, 96
      %v1070 = vpop.permute.xlu0 %1069
      %1071 = vrot.lane.b32.xlu0 %v648, 96
      %v1072 = vpop.permute.xlu0 %1071
      %1073 = vrot.lane.b32.xlu0 %v616, 96
      %v1074 = vpop.permute.xlu0 %1073
      %1075 = vrot.lane.b32.xlu0 %v656, 96
      %v1076 = vpop.permute.xlu0 %1075
      %1077 = vrot.lane.b32.xlu0 %v649, 96
      %v1078 = vpop.permute.xlu0 %1077
      %1079 = vrot.lane.b32.xlu0 %v617, 96
      %v1080 = vpop.permute.xlu0 %1079
      %1081 = vrot.lane.b32.xlu0 %v657, 96
      %v1082 = vpop.permute.xlu0 %1081
      %1083 = vrot.lane.b32.xlu0 %v650, 96
      %v1084 = vpop.permute.xlu0 %1083
      %1085 = vrot.lane.b32.xlu0 %v618, 96
      %v1086 = vpop.permute.xlu0 %1085
      %1087 = vrot.lane.b32.xlu0 %v658, 96
      %v1088 = vpop.permute.xlu0 %1087
      %1089 = vrot.lane.b32.xlu0 %v651, 96
      %v1090 = vpop.permute.xlu0 %1089
      %1091 = vrot.lane.b32.xlu0 %v619, 96
      %v1092 = vpop.permute.xlu0 %1091
      %1093 = vrot.lane.b32.xlu0 %v659, 96
      %v1094 = vpop.permute.xlu0 %1093
      %1095 = vrot.lane.b32.xlu0 %v652, 96
      %v1096 = vpop.permute.xlu0 %1095
      %1097 = vrot.lane.b32.xlu0 %v620, 96
      %v1098 = vpop.permute.xlu0 %1097
      %1099 = vrot.lane.b32.xlu0 %v660, 96
      %v1100 = vpop.permute.xlu0 %1099
      %1101 = vrot.lane.b32.xlu0 %v653, 96
      %v1102 = vpop.permute.xlu0 %1101
      %1103 = vrot.lane.b32.xlu0 %v621, 96
      %v1104 = vpop.permute.xlu0 %1103
      %1105 = vrot.lane.b32.xlu0 %v661, 96
      %v1106 = vpop.permute.xlu0 %1105
      %1107 = vrot.lane.b32.xlu0 %v654, 96
      %v1108 = vpop.permute.xlu0 %1107
      %1109 = vrot.lane.b32.xlu0 %v622, 96
      %v1110 = vpop.permute.xlu0 %1109
      %1111 = vrot.lane.b32.xlu0 %v662, 96
      %v1112 = vpop.permute.xlu0 %1111
      %vm1113 = vcmask 785408
      %v1114 = vsel %vm1113, %v1066, %v1068
      %v1115 = vsel %vm1113, %v1068, %v1070
      %v1116 = vsel %vm1113, %v1072, %v1074
      %v1117 = vsel %vm1113, %v1074, %v1076
      %v1118 = vsel %vm1113, %v1078, %v1080
      %v1119 = vsel %vm1113, %v1080, %v1082
      %v1120 = vsel %vm1113, %v1084, %v1086
      %v1121 = vsel %vm1113, %v1086, %v1088
      %v1122 = vsel %vm1113, %v1090, %v1092
      %v1123 = vsel %vm1113, %v1092, %v1094
      %v1124 = vsel %vm1113, %v1096, %v1098
      %v1125 = vsel %vm1113, %v1098, %v1100
      %v1126 = vsel %vm1113, %v1102, %v1104
      %v1127 = vsel %vm1113, %v1104, %v1106
      %v1128 = vsel %vm1113, %v1108, %v1110
      %v1129 = vsel %vm1113, %v1110, %v1112
      %v1146 = vsel %vm690, %v1114, 0.0
      %v1147 = vsel %vm691, %v1115, 0.0
      %v1148 = vsel %vm690, %v1116, 0.0
      %v1149 = vsel %vm691, %v1117, 0.0
      %v1150 = vsel %vm690, %v1118, 0.0
      %v1151 = vsel %vm691, %v1119, 0.0
      %v1152 = vsel %vm690, %v1120, 0.0
      %v1153 = vsel %vm691, %v1121, 0.0
      %v1154 = vsel %vm690, %v1122, 0.0
      %v1155 = vsel %vm691, %v1123, 0.0
      %v1156 = vsel %vm690, %v1124, 0.0
      %v1157 = vsel %vm691, %v1125, 0.0
      %v1158 = vsel %vm690, %v1126, 0.0
      %v1159 = vsel %vm691, %v1127, 0.0
      %v1160 = vsel %vm690, %v1128, 0.0
      %v1161 = vsel %vm691, %v1129, 0.0
      %v1162 = vpack.c.bf16 %v1147, %v1146
      %v1163 = vpack.c.bf16 %v1149, %v1148
      %v1164 = vpack.c.bf16 %v1151, %v1150
      %v1165 = vpack.c.bf16 %v1153, %v1152
      %v1166 = vpack.c.bf16 %v1155, %v1154
      %v1167 = vpack.c.bf16 %v1157, %v1156
      %v1168 = vpack.c.bf16 %v1159, %v1158
      %v1169 = vpack.c.bf16 %v1161, %v1160
      %1170 = vrot.lane.b32.xlu0 %v647, 94
      %v1171 = vpop.permute.xlu0 %1170
      %1172 = vrot.lane.b32.xlu0 %v615, 94
      %v1173 = vpop.permute.xlu0 %1172
      %1174 = vrot.lane.b32.xlu0 %v655, 94
      %v1175 = vpop.permute.xlu0 %1174
      %1176 = vrot.lane.b32.xlu0 %v648, 94
      %v1177 = vpop.permute.xlu0 %1176
      %1178 = vrot.lane.b32.xlu0 %v616, 94
      %v1179 = vpop.permute.xlu0 %1178
      %1180 = vrot.lane.b32.xlu0 %v656, 94
      %v1181 = vpop.permute.xlu0 %1180
      %1182 = vrot.lane.b32.xlu0 %v649, 94
      %v1183 = vpop.permute.xlu0 %1182
      %1184 = vrot.lane.b32.xlu0 %v617, 94
      %v1185 = vpop.permute.xlu0 %1184
      %1186 = vrot.lane.b32.xlu0 %v657, 94
      %v1187 = vpop.permute.xlu0 %1186
      %1188 = vrot.lane.b32.xlu0 %v650, 94
      %v1189 = vpop.permute.xlu0 %1188
      %1190 = vrot.lane.b32.xlu0 %v618, 94
      %v1191 = vpop.permute.xlu0 %1190
      %1192 = vrot.lane.b32.xlu0 %v658, 94
      %v1193 = vpop.permute.xlu0 %1192
      %1194 = vrot.lane.b32.xlu0 %v651, 94
      %v1195 = vpop.permute.xlu0 %1194
      %1196 = vrot.lane.b32.xlu0 %v619, 94
      %v1197 = vpop.permute.xlu0 %1196
      %1198 = vrot.lane.b32.xlu0 %v659, 94
      %v1199 = vpop.permute.xlu0 %1198
      %1200 = vrot.lane.b32.xlu0 %v652, 94
      %v1201 = vpop.permute.xlu0 %1200
      %1202 = vrot.lane.b32.xlu0 %v620, 94
      %v1203 = vpop.permute.xlu0 %1202
      %1204 = vrot.lane.b32.xlu0 %v660, 94
      %v1205 = vpop.permute.xlu0 %1204
      %1206 = vrot.lane.b32.xlu0 %v653, 94
      %v1207 = vpop.permute.xlu0 %1206
      %1208 = vrot.lane.b32.xlu0 %v621, 94
      %v1209 = vpop.permute.xlu0 %1208
      %1210 = vrot.lane.b32.xlu0 %v661, 94
      %v1211 = vpop.permute.xlu0 %1210
      %1212 = vrot.lane.b32.xlu0 %v654, 94
      %v1213 = vpop.permute.xlu0 %1212
      %1214 = vrot.lane.b32.xlu0 %v622, 94
      %v1215 = vpop.permute.xlu0 %1214
      %1216 = vrot.lane.b32.xlu0 %v662, 94
      %v1217 = vpop.permute.xlu0 %1216
      %vm1218 = vcmask 769024
      %v1219 = vsel %vm1218, %v1171, %v1173
      %v1220 = vsel %vm1218, %v1173, %v1175
      %v1221 = vsel %vm1218, %v1177, %v1179
      %v1222 = vsel %vm1218, %v1179, %v1181
      %v1223 = vsel %vm1218, %v1183, %v1185
      %v1224 = vsel %vm1218, %v1185, %v1187
      %v1225 = vsel %vm1218, %v1189, %v1191
      %v1226 = vsel %vm1218, %v1191, %v1193
      %v1227 = vsel %vm1218, %v1195, %v1197
      %v1228 = vsel %vm1218, %v1197, %v1199
      %v1229 = vsel %vm1218, %v1201, %v1203
      %v1230 = vsel %vm1218, %v1203, %v1205
      %v1231 = vsel %vm1218, %v1207, %v1209
      %v1232 = vsel %vm1218, %v1209, %v1211
      %v1233 = vsel %vm1218, %v1213, %v1215
      %v1234 = vsel %vm1218, %v1215, %v1217
      %v1251 = vsel %vm692, %v1219, 0.0
      %v1252 = vsel %vm693, %v1220, 0.0
      %v1253 = vsel %vm692, %v1221, 0.0
      %v1254 = vsel %vm693, %v1222, 0.0
      %v1255 = vsel %vm692, %v1223, 0.0
      %v1256 = vsel %vm693, %v1224, 0.0
      %v1257 = vsel %vm692, %v1225, 0.0
      %v1258 = vsel %vm693, %v1226, 0.0
      %v1259 = vsel %vm692, %v1227, 0.0
      %v1260 = vsel %vm693, %v1228, 0.0
      %v1261 = vsel %vm692, %v1229, 0.0
      %v1262 = vsel %vm693, %v1230, 0.0
      %v1263 = vsel %vm692, %v1231, 0.0
      %v1264 = vsel %vm693, %v1232, 0.0
      %v1265 = vsel %vm692, %v1233, 0.0
      %v1266 = vsel %vm693, %v1234, 0.0
      %v1267 = vpack.c.bf16 %v1252, %v1251
      %v1268 = vpack.c.bf16 %v1254, %v1253
      %v1269 = vpack.c.bf16 %v1256, %v1255
      %v1270 = vpack.c.bf16 %v1258, %v1257
      %v1271 = vpack.c.bf16 %v1260, %v1259
      %v1272 = vpack.c.bf16 %v1262, %v1261
      %v1273 = vpack.c.bf16 %v1264, %v1263
      %v1274 = vpack.c.bf16 %v1266, %v1265
      %v1283 = vunpack.c.l.b16 %v710
      %v1284 = vunpack.c.h.b16 %v710
      %v1285 = vunpack.c.l.b16 %v711
      %v1286 = vunpack.c.h.b16 %v711
      %v1287 = vunpack.c.l.b16 %v712
      %v1288 = vunpack.c.h.b16 %v712
      %v1289 = vunpack.c.l.b16 %v713
      %v1290 = vunpack.c.h.b16 %v713
      %v1291 = vunpack.c.l.b16 %v714
      %v1292 = vunpack.c.h.b16 %v714
      %v1293 = vunpack.c.l.b16 %v715
      %v1294 = vunpack.c.h.b16 %v715
      %v1295 = vunpack.c.l.b16 %v716
      %v1296 = vunpack.c.h.b16 %v716
      %v1297 = vunpack.c.l.b16 %v717
      %v1298 = vunpack.c.h.b16 %v717
      %v1299 = vpack.c.b16 %v1285, %v1283
      %v1300 = vpack.c.b16 %v1286, %v1284
      %v1301 = vpack.c.b16 %v1289, %v1287
      %v1302 = vpack.c.b16 %v1290, %v1288
      %v1303 = vpack.c.b16 %v1293, %v1291
      %v1304 = vpack.c.b16 %v1294, %v1292
      %v1305 = vpack.c.b16 %v1297, %v1295
      %v1306 = vpack.c.b16 %v1298, %v1296
      %v1331 = vunpack.c.l.b16 %v718
      %v1332 = vunpack.c.h.b16 %v718
      %v1333 = vunpack.c.l.b16 %v719
      %v1334 = vunpack.c.l.b16 %v720
      %v1335 = vunpack.c.h.b16 %v720
      %v1336 = vunpack.c.l.b16 %v721
      %v1337 = vunpack.c.l.b16 %v722
      %v1338 = vunpack.c.h.b16 %v722
      %v1339 = vunpack.c.l.b16 %v723
      %v1340 = vunpack.c.l.b16 %v724
      %v1341 = vunpack.c.h.b16 %v724
      %v1342 = vunpack.c.l.b16 %v725
      %v1343 = vunpack.c.l.b16 %v726
      %v1344 = vunpack.c.h.b16 %v726
      %v1345 = vunpack.c.l.b16 %v727
      %v1346 = vunpack.c.l.b16 %v728
      %v1347 = vunpack.c.h.b16 %v728
      %v1348 = vunpack.c.l.b16 %v729
      %v1349 = vunpack.c.l.b16 %v730
      %v1350 = vunpack.c.h.b16 %v730
      %v1351 = vunpack.c.l.b16 %v731
      %v1352 = vunpack.c.l.b16 %v732
      %v1353 = vunpack.c.h.b16 %v732
      %v1354 = vunpack.c.l.b16 %v733
      %v1355 = vpack.c.b16 %v1334, %v1331
      %v1356 = vpack.c.b16 %v1335, %v1332
      %v1357 = vpack.c.b16 %v1336, %v1333
      %v1358 = vpack.c.b16 %v1340, %v1337
      %v1359 = vpack.c.b16 %v1341, %v1338
      %v1360 = vpack.c.b16 %v1342, %v1339
      %v1361 = vpack.c.b16 %v1346, %v1343
      %v1362 = vpack.c.b16 %v1347, %v1344
      %v1363 = vpack.c.b16 %v1348, %v1345
      %v1364 = vpack.c.b16 %v1352, %v1349
      %v1365 = vpack.c.b16 %v1353, %v1350
      %v1366 = vpack.c.b16 %v1354, %v1351
      %1367 = vrot.lane.b32.xlu0 %v1355, 127
      %v1368 = vpop.permute.xlu0 %1367
      %1369 = vrot.lane.b32.xlu0 %v1356, 127
      %v1370 = vpop.permute.xlu0 %1369
      %1371 = vrot.lane.b32.xlu0 %v1357, 127
      %v1372 = vpop.permute.xlu0 %1371
      %1373 = vrot.lane.b32.xlu0 %v1358, 127
      %v1374 = vpop.permute.xlu0 %1373
      %1375 = vrot.lane.b32.xlu0 %v1359, 127
      %v1376 = vpop.permute.xlu0 %1375
      %1377 = vrot.lane.b32.xlu0 %v1360, 127
      %v1378 = vpop.permute.xlu0 %1377
      %1379 = vrot.lane.b32.xlu0 %v1361, 127
      %v1380 = vpop.permute.xlu0 %1379
      %1381 = vrot.lane.b32.xlu0 %v1362, 127
      %v1382 = vpop.permute.xlu0 %1381
      %1383 = vrot.lane.b32.xlu0 %v1363, 127
      %v1384 = vpop.permute.xlu0 %1383
      %1385 = vrot.lane.b32.xlu0 %v1364, 127
      %v1386 = vpop.permute.xlu0 %1385
      %1387 = vrot.lane.b32.xlu0 %v1365, 127
      %v1388 = vpop.permute.xlu0 %1387
      %1389 = vrot.lane.b32.xlu0 %v1366, 127
      %v1390 = vpop.permute.xlu0 %1389
      %vm1391 = vcmask 1039360
      %v1392 = vsel %vm1391, %v1368, %v1370
      %v1393 = vsel %vm1391, %v1370, %v1372
      %v1394 = vsel %vm1391, %v1374, %v1376
      %v1395 = vsel %vm1391, %v1376, %v1378
      %v1396 = vsel %vm1391, %v1380, %v1382
      %v1397 = vsel %vm1391, %v1382, %v1384
      %v1398 = vsel %vm1391, %v1386, %v1388
      %v1399 = vsel %vm1391, %v1388, %v1390
      %v1416 = vunpack.c.l.b16 %v847
      %v1417 = vunpack.c.h.b16 %v847
      %v1418 = vunpack.c.l.b16 %v848
      %v1419 = vunpack.c.h.b16 %v848
      %v1420 = vunpack.c.l.b16 %v849
      %v1421 = vunpack.c.h.b16 %v849
      %v1422 = vunpack.c.l.b16 %v850
      %v1423 = vunpack.c.h.b16 %v850
      %v1424 = vunpack.c.l.b16 %v851
      %v1425 = vunpack.c.h.b16 %v851
      %v1426 = vunpack.c.l.b16 %v852
      %v1427 = vunpack.c.h.b16 %v852
      %v1428 = vunpack.c.l.b16 %v853
      %v1429 = vunpack.c.h.b16 %v853
      %v1430 = vunpack.c.l.b16 %v854
      %v1431 = vunpack.c.h.b16 %v854
      %v1432 = vpack.c.b16 %v1418, %v1416
      %v1433 = vpack.c.b16 %v1419, %v1417
      %v1434 = vpack.c.b16 %v1422, %v1420
      %v1435 = vpack.c.b16 %v1423, %v1421
      %v1436 = vpack.c.b16 %v1426, %v1424
      %v1437 = vpack.c.b16 %v1427, %v1425
      %v1438 = vpack.c.b16 %v1430, %v1428
      %v1439 = vpack.c.b16 %v1431, %v1429
      %v1456 = vunpack.c.l.b16 %v952
      %v1457 = vunpack.c.h.b16 %v952
      %v1458 = vunpack.c.l.b16 %v953
      %v1459 = vunpack.c.h.b16 %v953
      %v1460 = vunpack.c.l.b16 %v954
      %v1461 = vunpack.c.h.b16 %v954
      %v1462 = vunpack.c.l.b16 %v955
      %v1463 = vunpack.c.h.b16 %v955
      %v1464 = vunpack.c.l.b16 %v956
      %v1465 = vunpack.c.h.b16 %v956
      %v1466 = vunpack.c.l.b16 %v957
      %v1467 = vunpack.c.h.b16 %v957
      %v1468 = vunpack.c.l.b16 %v958
      %v1469 = vunpack.c.h.b16 %v958
      %v1470 = vunpack.c.l.b16 %v959
      %v1471 = vunpack.c.h.b16 %v959
      %v1472 = vpack.c.b16 %v1458, %v1456
      %v1473 = vpack.c.b16 %v1459, %v1457
      %v1474 = vpack.c.b16 %v1462, %v1460
      %v1475 = vpack.c.b16 %v1463, %v1461
      %v1476 = vpack.c.b16 %v1466, %v1464
      %v1477 = vpack.c.b16 %v1467, %v1465
      %v1478 = vpack.c.b16 %v1470, %v1468
      %v1479 = vpack.c.b16 %v1471, %v1469
      %1488 = vrot.lane.b32.xlu0 %v1355, 111
      %v1489 = vpop.permute.xlu0 %1488
      %1490 = vrot.lane.b32.xlu0 %v1356, 111
      %v1491 = vpop.permute.xlu0 %1490
      %1492 = vrot.lane.b32.xlu0 %v1357, 111
      %v1493 = vpop.permute.xlu0 %1492
      %1494 = vrot.lane.b32.xlu0 %v1358, 111
      %v1495 = vpop.permute.xlu0 %1494
      %1496 = vrot.lane.b32.xlu0 %v1359, 111
      %v1497 = vpop.permute.xlu0 %1496
      %1498 = vrot.lane.b32.xlu0 %v1360, 111
      %v1499 = vpop.permute.xlu0 %1498
      %1500 = vrot.lane.b32.xlu0 %v1361, 111
      %v1501 = vpop.permute.xlu0 %1500
      %1502 = vrot.lane.b32.xlu0 %v1362, 111
      %v1503 = vpop.permute.xlu0 %1502
      %1504 = vrot.lane.b32.xlu0 %v1363, 111
      %v1505 = vpop.permute.xlu0 %1504
      %1506 = vrot.lane.b32.xlu0 %v1364, 111
      %v1507 = vpop.permute.xlu0 %1506
      %1508 = vrot.lane.b32.xlu0 %v1365, 111
      %v1509 = vpop.permute.xlu0 %1508
      %1510 = vrot.lane.b32.xlu0 %v1366, 111
      %v1511 = vpop.permute.xlu0 %1510
      %vm1512 = vcmask 908288
      %v1513 = vsel %vm1512, %v1489, %v1491
      %v1514 = vsel %vm1512, %v1491, %v1493
      %v1515 = vsel %vm1512, %v1495, %v1497
      %v1516 = vsel %vm1512, %v1497, %v1499
      %v1517 = vsel %vm1512, %v1501, %v1503
      %v1518 = vsel %vm1512, %v1503, %v1505
      %v1519 = vsel %vm1512, %v1507, %v1509
      %v1520 = vsel %vm1512, %v1509, %v1511
      %v1537 = vunpack.c.l.b16 %v1057
      %v1538 = vunpack.c.h.b16 %v1057
      %v1539 = vunpack.c.l.b16 %v1058
      %v1540 = vunpack.c.h.b16 %v1058
      %v1541 = vunpack.c.l.b16 %v1059
      %v1542 = vunpack.c.h.b16 %v1059
      %v1543 = vunpack.c.l.b16 %v1060
      %v1544 = vunpack.c.h.b16 %v1060
      %v1545 = vunpack.c.l.b16 %v1061
      %v1546 = vunpack.c.h.b16 %v1061
      %v1547 = vunpack.c.l.b16 %v1062
      %v1548 = vunpack.c.h.b16 %v1062
      %v1549 = vunpack.c.l.b16 %v1063
      %v1550 = vunpack.c.h.b16 %v1063
      %v1551 = vunpack.c.l.b16 %v1064
      %v1552 = vunpack.c.h.b16 %v1064
      %v1553 = vpack.c.b16 %v1539, %v1537
      %v1554 = vpack.c.b16 %v1540, %v1538
      %v1555 = vpack.c.b16 %v1543, %v1541
      %v1556 = vpack.c.b16 %v1544, %v1542
      %v1557 = vpack.c.b16 %v1547, %v1545
      %v1558 = vpack.c.b16 %v1548, %v1546
      %v1559 = vpack.c.b16 %v1551, %v1549
      %v1560 = vpack.c.b16 %v1552, %v1550
      %v1577 = vunpack.c.l.b16 %v1162
      %v1578 = vunpack.c.h.b16 %v1162
      %v1579 = vunpack.c.l.b16 %v1163
      %v1580 = vunpack.c.h.b16 %v1163
      %v1581 = vunpack.c.l.b16 %v1164
      %v1582 = vunpack.c.h.b16 %v1164
      %v1583 = vunpack.c.l.b16 %v1165
      %v1584 = vunpack.c.h.b16 %v1165
      %v1585 = vunpack.c.l.b16 %v1166
      %v1586 = vunpack.c.h.b16 %v1166
      %v1587 = vunpack.c.l.b16 %v1167
      %v1588 = vunpack.c.h.b16 %v1167
      %v1589 = vunpack.c.l.b16 %v1168
      %v1590 = vunpack.c.h.b16 %v1168
      %v1591 = vunpack.c.l.b16 %v1169
      %v1592 = vunpack.c.h.b16 %v1169
      %v1593 = vpack.c.b16 %v1579, %v1577
      %v1594 = vpack.c.b16 %v1580, %v1578
      %v1595 = vpack.c.b16 %v1583, %v1581
      %v1596 = vpack.c.b16 %v1584, %v1582
      %v1597 = vpack.c.b16 %v1587, %v1585
      %v1598 = vpack.c.b16 %v1588, %v1586
      %v1599 = vpack.c.b16 %v1591, %v1589
      %v1600 = vpack.c.b16 %v1592, %v1590
      %1609 = vrot.lane.b32.xlu0 %v1355, 95
      %v1610 = vpop.permute.xlu0 %1609
      %1611 = vrot.lane.b32.xlu0 %v1356, 95
      %v1612 = vpop.permute.xlu0 %1611
      %1613 = vrot.lane.b32.xlu0 %v1357, 95
      %v1614 = vpop.permute.xlu0 %1613
      %1615 = vrot.lane.b32.xlu0 %v1358, 95
      %v1616 = vpop.permute.xlu0 %1615
      %1617 = vrot.lane.b32.xlu0 %v1359, 95
      %v1618 = vpop.permute.xlu0 %1617
      %1619 = vrot.lane.b32.xlu0 %v1360, 95
      %v1620 = vpop.permute.xlu0 %1619
      %1621 = vrot.lane.b32.xlu0 %v1361, 95
      %v1622 = vpop.permute.xlu0 %1621
      %1623 = vrot.lane.b32.xlu0 %v1362, 95
      %v1624 = vpop.permute.xlu0 %1623
      %1625 = vrot.lane.b32.xlu0 %v1363, 95
      %v1626 = vpop.permute.xlu0 %1625
      %1627 = vrot.lane.b32.xlu0 %v1364, 95
      %v1628 = vpop.permute.xlu0 %1627
      %1629 = vrot.lane.b32.xlu0 %v1365, 95
      %v1630 = vpop.permute.xlu0 %1629
      %1631 = vrot.lane.b32.xlu0 %v1366, 95
      %v1632 = vpop.permute.xlu0 %1631
      %vm1633 = vcmask 777216
      %v1634 = vsel %vm1633, %v1610, %v1612
      %v1635 = vsel %vm1633, %v1612, %v1614
      %v1636 = vsel %vm1633, %v1616, %v1618
      %v1637 = vsel %vm1633, %v1618, %v1620
      %v1638 = vsel %vm1633, %v1622, %v1624
      %v1639 = vsel %vm1633, %v1624, %v1626
      %v1640 = vsel %vm1633, %v1628, %v1630
      %v1641 = vsel %vm1633, %v1630, %v1632
      %v1658 = vunpack.c.l.b16 %v1267
      %v1659 = vunpack.c.h.b16 %v1267
      %v1660 = vunpack.c.l.b16 %v1268
      %v1661 = vunpack.c.h.b16 %v1268
      %v1662 = vunpack.c.l.b16 %v1269
      %v1663 = vunpack.c.h.b16 %v1269
      %v1664 = vunpack.c.l.b16 %v1270
      %v1665 = vunpack.c.h.b16 %v1270
      %v1666 = vunpack.c.l.b16 %v1271
      %v1667 = vunpack.c.h.b16 %v1271
      %v1668 = vunpack.c.l.b16 %v1272
      %v1669 = vunpack.c.h.b16 %v1272
      %v1670 = vunpack.c.l.b16 %v1273
      %v1671 = vunpack.c.h.b16 %v1273
      %v1672 = vunpack.c.l.b16 %v1274
      %v1673 = vunpack.c.h.b16 %v1274
      %v1674 = vpack.c.b16 %v1660, %v1658
      %v1675 = vpack.c.b16 %v1661, %v1659
      %v1676 = vpack.c.b16 %v1664, %v1662
      %v1677 = vpack.c.b16 %v1665, %v1663
      %v1678 = vpack.c.b16 %v1668, %v1666
      %v1679 = vpack.c.b16 %v1669, %v1667
      %v1680 = vpack.c.b16 %v1672, %v1670
      %v1681 = vpack.c.b16 %v1673, %v1671
      %v1690 = vld [vmem:[%s4] sm:$0xff]
      %v1691 = vld [vmem:[%s4 + $0x8] sm:$0xff]
      %v1692 = vld [vmem:[%s4 + $0x10] sm:$0xf]
      %v1693 = vld [vmem:[%s4 + $0x14] sm:$0xff]
      %v1694 = vld [vmem:[%s4 + $0x1c] sm:$0xff]
      %v1695 = vld [vmem:[%s4 + $0x24] sm:$0xf]
      %v1696 = vld [vmem:[%s4 + $0x28] sm:$0xff]
      %v1697 = vld [vmem:[%s4 + $0x30] sm:$0xff]
      %v1698 = vld [vmem:[%s4 + $0x38] sm:$0xf]
      %v1699 = vld [vmem:[%s4 + $0x3c] sm:$0xff]
      %v1700 = vld [vmem:[%s4 + $0x44] sm:$0xff]
      %v1701 = vld [vmem:[%s4 + $0x4c] sm:$0xf]
      %v1702 = vld [vmem:[%s4 + $0x50] sm:$0xff]
      %v1703 = vld [vmem:[%s4 + $0x58] sm:$0xff]
      %v1704 = vld [vmem:[%s4 + $0x60] sm:$0xf]
      %v1705 = vld [vmem:[%s4 + $0x64] sm:$0xff]
      %v1706 = vld [vmem:[%s4 + $0x6c] sm:$0xff]
      %v1707 = vld [vmem:[%s4 + $0x74] sm:$0xf]
      %v1708 = vld [vmem:[%s4 + $0x78] sm:$0xff]
      %v1709 = vld [vmem:[%s4 + $0x80] sm:$0xff]
      %v1710 = vld [vmem:[%s4 + $0x88] sm:$0xf]
      %v1711 = vld [vmem:[%s4 + $0x8c] sm:$0xff]
      %v1712 = vld [vmem:[%s4 + $0x94] sm:$0xff]
      %v1713 = vld [vmem:[%s4 + $0x9c] sm:$0xf]
      %v1738 = vunpack.c.l.b16 %v1690
      %v1739 = vunpack.c.h.b16 %v1690
      %v1740 = vunpack.c.l.b16 %v1691
      %v1741 = vunpack.c.h.b16 %v1691
      %v1742 = vunpack.c.l.b16 %v1692
      %v1743 = vunpack.c.l.b16 %v1693
      %v1744 = vunpack.c.h.b16 %v1693
      %v1745 = vunpack.c.l.b16 %v1694
      %v1746 = vunpack.c.h.b16 %v1694
      %v1747 = vunpack.c.l.b16 %v1695
      %v1748 = vunpack.c.l.b16 %v1696
      %v1749 = vunpack.c.h.b16 %v1696
      %v1750 = vunpack.c.l.b16 %v1697
      %v1751 = vunpack.c.h.b16 %v1697
      %v1752 = vunpack.c.l.b16 %v1698
      %v1753 = vunpack.c.l.b16 %v1699
      %v1754 = vunpack.c.h.b16 %v1699
      %v1755 = vunpack.c.l.b16 %v1700
      %v1756 = vunpack.c.h.b16 %v1700
      %v1757 = vunpack.c.l.b16 %v1701
      %v1758 = vunpack.c.l.b16 %v1702
      %v1759 = vunpack.c.h.b16 %v1702
      %v1760 = vunpack.c.l.b16 %v1703
      %v1761 = vunpack.c.h.b16 %v1703
      %v1762 = vunpack.c.l.b16 %v1704
      %v1763 = vunpack.c.l.b16 %v1705
      %v1764 = vunpack.c.h.b16 %v1705
      %v1765 = vunpack.c.l.b16 %v1706
      %v1766 = vunpack.c.h.b16 %v1706
      %v1767 = vunpack.c.l.b16 %v1707
      %v1768 = vunpack.c.l.b16 %v1708
      %v1769 = vunpack.c.h.b16 %v1708
      %v1770 = vunpack.c.l.b16 %v1709
      %v1771 = vunpack.c.h.b16 %v1709
      %v1772 = vunpack.c.l.b16 %v1710
      %v1773 = vunpack.c.l.b16 %v1711
      %v1774 = vunpack.c.h.b16 %v1711
      %v1775 = vunpack.c.l.b16 %v1712
      %v1776 = vunpack.c.h.b16 %v1712
      %v1777 = vunpack.c.l.b16 %v1713
      %v1778 = vpack.c.b16 %v1743, %v1738
      %v1779 = vpack.c.b16 %v1744, %v1739
      %v1780 = vpack.c.b16 %v1745, %v1740
      %v1781 = vpack.c.b16 %v1746, %v1741
      %v1782 = vpack.c.b16 %v1747, %v1742
      %v1783 = vpack.c.b16 %v1753, %v1748
      %v1784 = vpack.c.b16 %v1754, %v1749
      %v1785 = vpack.c.b16 %v1755, %v1750
      %v1786 = vpack.c.b16 %v1756, %v1751
      %v1787 = vpack.c.b16 %v1757, %v1752
      %v1788 = vpack.c.b16 %v1763, %v1758
      %v1789 = vpack.c.b16 %v1764, %v1759
      %v1790 = vpack.c.b16 %v1765, %v1760
      %v1791 = vpack.c.b16 %v1766, %v1761
      %v1792 = vpack.c.b16 %v1767, %v1762
      %v1793 = vpack.c.b16 %v1773, %v1768
      %v1794 = vpack.c.b16 %v1774, %v1769
      %v1795 = vpack.c.b16 %v1775, %v1770
      %v1796 = vpack.c.b16 %v1776, %v1771
      %v1797 = vpack.c.b16 %v1777, %v1772
      %vm1814 = vcmask 523264
      %v1816 = vsel %vm1814, %v1782, 0
      %v1819 = vsel %vm1814, %v1787, 0
      %v1822 = vsel %vm1814, %v1792, 0
      %v1825 = vsel %vm1814, %v1797, 0
      %1827 = vmatpush.bf16.msra.mxu0 %v1398
      %1828 = vmatpush.bf16.msra.mxu0 %v1396
      %1829 = vmatpush.bf16.msra.mxu0 %v1394
      %1830 = vmatpush.bf16.msra.mxu0 %v1392
      %1831 = vmatpush.bf16.msra.mxu0 %v1305
      %1832 = vmatpush.bf16.msra.mxu0 %v1303
      %1833 = vmatpush.bf16.msra.mxu0 %v1301
      %1834 = vmatpush.bf16.msra.mxu0 %v1299
      %1835 = vmatmul.bf16.gmra.mxu0 %v1778
      %v1836 = vpop.f32.mrf.mxu0
      %v1837 = vadd.f32 0.0, %v1836
      %v1838 = vpop.f32.mrf.mxu0
      %v1839 = vadd.f32 0.0, %v1838
      %1840 = vmatmul.bf16.gmra.mxu0 %v1783
      %v1841 = vpop.f32.mrf.mxu0
      %v1842 = vadd.f32 0.0, %v1841
      %v1843 = vpop.f32.mrf.mxu0
      %v1844 = vadd.f32 0.0, %v1843
      %1845 = vmatmul.bf16.gmra.mxu0 %v1788
      %v1846 = vpop.f32.mrf.mxu0
      %v1847 = vadd.f32 0.0, %v1846
      %v1848 = vpop.f32.mrf.mxu0
      %v1849 = vadd.f32 0.0, %v1848
      %1850 = vmatmul.bf16.gmra.mxu0 %v1793
      %v1851 = vpop.f32.mrf.mxu0
      %v1852 = vadd.f32 0.0, %v1851
      %v1853 = vpop.f32.mrf.mxu0
      %v1854 = vadd.f32 0.0, %v1853
      %1855 = vdwg.mxu0
      %1856 = vmatpush.bf16.msra.mxu0 %v1478
      %1857 = vmatpush.bf16.msra.mxu0 %v1476
      %1858 = vmatpush.bf16.msra.mxu0 %v1474
      %1859 = vmatpush.bf16.msra.mxu0 %v1472
      %1860 = vmatpush.bf16.msra.mxu0 %v1438
      %1861 = vmatpush.bf16.msra.mxu0 %v1436
      %1862 = vmatpush.bf16.msra.mxu0 %v1434
      %1863 = vmatpush.bf16.msra.mxu0 %v1432
      %1864 = vmatmul.bf16.gmra.mxu0 %v1779
      %v1865 = vpop.f32.mrf.mxu0
      %v1866 = vadd.f32 %v1837, %v1865
      %v1867 = vpop.f32.mrf.mxu0
      %v1868 = vadd.f32 %v1839, %v1867
      %1869 = vmatmul.bf16.gmra.mxu0 %v1784
      %v1870 = vpop.f32.mrf.mxu0
      %v1871 = vadd.f32 %v1842, %v1870
      %v1872 = vpop.f32.mrf.mxu0
      %v1873 = vadd.f32 %v1844, %v1872
      %1874 = vmatmul.bf16.gmra.mxu0 %v1789
      %v1875 = vpop.f32.mrf.mxu0
      %v1876 = vadd.f32 %v1847, %v1875
      %v1877 = vpop.f32.mrf.mxu0
      %v1878 = vadd.f32 %v1849, %v1877
      %1879 = vmatmul.bf16.gmra.mxu0 %v1794
      %v1880 = vpop.f32.mrf.mxu0
      %v1881 = vadd.f32 %v1852, %v1880
      %v1882 = vpop.f32.mrf.mxu0
      %v1883 = vadd.f32 %v1854, %v1882
      %1884 = vdwg.mxu0
      %1885 = vmatpush.bf16.msra.mxu0 %v1559
      %1886 = vmatpush.bf16.msra.mxu0 %v1557
      %1887 = vmatpush.bf16.msra.mxu0 %v1555
      %1888 = vmatpush.bf16.msra.mxu0 %v1553
      %1889 = vmatpush.bf16.msra.mxu0 %v1519
      %1890 = vmatpush.bf16.msra.mxu0 %v1517
      %1891 = vmatpush.bf16.msra.mxu0 %v1515
      %1892 = vmatpush.bf16.msra.mxu0 %v1513
      %1893 = vmatmul.bf16.gmra.mxu0 %v1780
      %v1894 = vpop.f32.mrf.mxu0
      %v1895 = vadd.f32 %v1866, %v1894
      %v1896 = vpop.f32.mrf.mxu0
      %v1897 = vadd.f32 %v1868, %v1896
      %1898 = vmatmul.bf16.gmra.mxu0 %v1785
      %v1899 = vpop.f32.mrf.mxu0
      %v1900 = vadd.f32 %v1871, %v1899
      %v1901 = vpop.f32.mrf.mxu0
      %v1902 = vadd.f32 %v1873, %v1901
      %1903 = vmatmul.bf16.gmra.mxu0 %v1790
      %v1904 = vpop.f32.mrf.mxu0
      %v1905 = vadd.f32 %v1876, %v1904
      %v1906 = vpop.f32.mrf.mxu0
      %v1907 = vadd.f32 %v1878, %v1906
      %1908 = vmatmul.bf16.gmra.mxu0 %v1795
      %v1909 = vpop.f32.mrf.mxu0
      %v1910 = vadd.f32 %v1881, %v1909
      %v1911 = vpop.f32.mrf.mxu0
      %v1912 = vadd.f32 %v1883, %v1911
      %1913 = vdwg.mxu0
      %1914 = vmatpush.bf16.msra.mxu0 %v1640
      %1915 = vmatpush.bf16.msra.mxu0 %v1638
      %1916 = vmatpush.bf16.msra.mxu0 %v1636
      %1917 = vmatpush.bf16.msra.mxu0 %v1634
      %1918 = vmatpush.bf16.msra.mxu0 %v1599
      %1919 = vmatpush.bf16.msra.mxu0 %v1597
      %1920 = vmatpush.bf16.msra.mxu0 %v1595
      %1921 = vmatpush.bf16.msra.mxu0 %v1593
      %1922 = vmatmul.bf16.gmra.mxu0 %v1781
      %v1923 = vpop.f32.mrf.mxu0
      %v1924 = vadd.f32 %v1895, %v1923
      %v1925 = vpop.f32.mrf.mxu0
      %v1926 = vadd.f32 %v1897, %v1925
      %1927 = vmatmul.bf16.gmra.mxu0 %v1786
      %v1928 = vpop.f32.mrf.mxu0
      %v1929 = vadd.f32 %v1900, %v1928
      %v1930 = vpop.f32.mrf.mxu0
      %v1931 = vadd.f32 %v1902, %v1930
      %1932 = vmatmul.bf16.gmra.mxu0 %v1791
      %v1933 = vpop.f32.mrf.mxu0
      %v1934 = vadd.f32 %v1905, %v1933
      %v1935 = vpop.f32.mrf.mxu0
      %v1936 = vadd.f32 %v1907, %v1935
      %1937 = vmatmul.bf16.gmra.mxu0 %v1796
      %v1938 = vpop.f32.mrf.mxu0
      %v1939 = vadd.f32 %v1910, %v1938
      %v1940 = vpop.f32.mrf.mxu0
      %v1941 = vadd.f32 %v1912, %v1940
      %1942 = vdwg.mxu0
      %1943 = vmatpush.bf16.msra.mxu0 0
      %1944 = vmatpush.bf16.msra.mxu0 0
      %1945 = vmatpush.bf16.msra.mxu0 0
      %1946 = vmatpush.bf16.msra.mxu0 0
      %1947 = vmatpush.bf16.msra.mxu0 %v1680
      %1948 = vmatpush.bf16.msra.mxu0 %v1678
      %1949 = vmatpush.bf16.msra.mxu0 %v1676
      %1950 = vmatpush.bf16.msra.mxu0 %v1674
      %1951 = vmatmul.bf16.gmra.mxu0 %v1816
      %v1952 = vpop.f32.mrf.mxu0
      %v1953 = vadd.f32 %v1924, %v1952
      %v1954 = vpop.f32.mrf.mxu0
      %v1955 = vadd.f32 %v1926, %v1954
      %1956 = vmatmul.bf16.gmra.mxu0 %v1819
      %v1957 = vpop.f32.mrf.mxu0
      %v1958 = vadd.f32 %v1929, %v1957
      %v1959 = vpop.f32.mrf.mxu0
      %v1960 = vadd.f32 %v1931, %v1959
      %1961 = vmatmul.bf16.gmra.mxu0 %v1822
      %v1962 = vpop.f32.mrf.mxu0
      %v1963 = vadd.f32 %v1934, %v1962
      %v1964 = vpop.f32.mrf.mxu0
      %v1965 = vadd.f32 %v1936, %v1964
      %1966 = vmatmul.bf16.gmra.mxu0 %v1825
      %v1967 = vpop.f32.mrf.mxu0
      %v1968 = vadd.f32 %v1939, %v1967
      %v1969 = vpop.f32.mrf.mxu0
      %v1970 = vadd.f32 %v1941, %v1969
      %1971 = vdwg.mxu0
      %1972 = vmatpush.bf16.msra.mxu0 %v1399
      %1973 = vmatpush.bf16.msra.mxu0 %v1397
      %1974 = vmatpush.bf16.msra.mxu0 %v1395
      %1975 = vmatpush.bf16.msra.mxu0 %v1393
      %1976 = vmatpush.bf16.msra.mxu0 %v1306
      %1977 = vmatpush.bf16.msra.mxu0 %v1304
      %1978 = vmatpush.bf16.msra.mxu0 %v1302
      %1979 = vmatpush.bf16.msra.mxu0 %v1300
      %1980 = vmatmul.bf16.gmra.mxu0 %v1778
      %v1981 = vpop.f32.mrf.mxu0
      %v1982 = vadd.f32 0.0, %v1981
      %v1983 = vpop.f32.mrf.mxu0
      %v1984 = vadd.f32 0.0, %v1983
      %1985 = vmatmul.bf16.gmra.mxu0 %v1783
      %v1986 = vpop.f32.mrf.mxu0
      %v1987 = vadd.f32 0.0, %v1986
      %v1988 = vpop.f32.mrf.mxu0
      %v1989 = vadd.f32 0.0, %v1988
      %1990 = vmatmul.bf16.gmra.mxu0 %v1788
      %v1991 = vpop.f32.mrf.mxu0
      %v1992 = vadd.f32 0.0, %v1991
      %v1993 = vpop.f32.mrf.mxu0
      %v1994 = vadd.f32 0.0, %v1993
      %1995 = vmatmul.bf16.gmra.mxu0 %v1793
      %v1996 = vpop.f32.mrf.mxu0
      %v1997 = vadd.f32 0.0, %v1996
      %v1998 = vpop.f32.mrf.mxu0
      %v1999 = vadd.f32 0.0, %v1998
      %2000 = vdwg.mxu0
      %2001 = vmatpush.bf16.msra.mxu0 %v1479
      %2002 = vmatpush.bf16.msra.mxu0 %v1477
      %2003 = vmatpush.bf16.msra.mxu0 %v1475
      %2004 = vmatpush.bf16.msra.mxu0 %v1473
      %2005 = vmatpush.bf16.msra.mxu0 %v1439
      %2006 = vmatpush.bf16.msra.mxu0 %v1437
      %2007 = vmatpush.bf16.msra.mxu0 %v1435
      %2008 = vmatpush.bf16.msra.mxu0 %v1433
      %2009 = vmatmul.bf16.gmra.mxu0 %v1779
      %v2010 = vpop.f32.mrf.mxu0
      %v2011 = vadd.f32 %v1982, %v2010
      %v2012 = vpop.f32.mrf.mxu0
      %v2013 = vadd.f32 %v1984, %v2012
      %2014 = vmatmul.bf16.gmra.mxu0 %v1784
      %v2015 = vpop.f32.mrf.mxu0
      %v2016 = vadd.f32 %v1987, %v2015
      %v2017 = vpop.f32.mrf.mxu0
      %v2018 = vadd.f32 %v1989, %v2017
      %2019 = vmatmul.bf16.gmra.mxu0 %v1789
      %v2020 = vpop.f32.mrf.mxu0
      %v2021 = vadd.f32 %v1992, %v2020
      %v2022 = vpop.f32.mrf.mxu0
      %v2023 = vadd.f32 %v1994, %v2022
      %2024 = vmatmul.bf16.gmra.mxu0 %v1794
      %v2025 = vpop.f32.mrf.mxu0
      %v2026 = vadd.f32 %v1997, %v2025
      %v2027 = vpop.f32.mrf.mxu0
      %v2028 = vadd.f32 %v1999, %v2027
      %2029 = vdwg.mxu0
      %2030 = vmatpush.bf16.msra.mxu0 %v1560
      %2031 = vmatpush.bf16.msra.mxu0 %v1558
      %2032 = vmatpush.bf16.msra.mxu0 %v1556
      %2033 = vmatpush.bf16.msra.mxu0 %v1554
      %2034 = vmatpush.bf16.msra.mxu0 %v1520
      %2035 = vmatpush.bf16.msra.mxu0 %v1518
      %2036 = vmatpush.bf16.msra.mxu0 %v1516
      %2037 = vmatpush.bf16.msra.mxu0 %v1514
      %2038 = vmatmul.bf16.gmra.mxu0 %v1780
      %v2039 = vpop.f32.mrf.mxu0
      %v2040 = vadd.f32 %v2011, %v2039
      %v2041 = vpop.f32.mrf.mxu0
      %v2042 = vadd.f32 %v2013, %v2041
      %2043 = vmatmul.bf16.gmra.mxu0 %v1785
      %v2044 = vpop.f32.mrf.mxu0
      %v2045 = vadd.f32 %v2016, %v2044
      %v2046 = vpop.f32.mrf.mxu0
      %v2047 = vadd.f32 %v2018, %v2046
      %2048 = vmatmul.bf16.gmra.mxu0 %v1790
      %v2049 = vpop.f32.mrf.mxu0
      %v2050 = vadd.f32 %v2021, %v2049
      %v2051 = vpop.f32.mrf.mxu0
      %v2052 = vadd.f32 %v2023, %v2051
      %2053 = vmatmul.bf16.gmra.mxu0 %v1795
      %v2054 = vpop.f32.mrf.mxu0
      %v2055 = vadd.f32 %v2026, %v2054
      %v2056 = vpop.f32.mrf.mxu0
      %v2057 = vadd.f32 %v2028, %v2056
      %2058 = vdwg.mxu0
      %2059 = vmatpush.bf16.msra.mxu0 %v1641
      %2060 = vmatpush.bf16.msra.mxu0 %v1639
      %2061 = vmatpush.bf16.msra.mxu0 %v1637
      %2062 = vmatpush.bf16.msra.mxu0 %v1635
      %2063 = vmatpush.bf16.msra.mxu0 %v1600
      %2064 = vmatpush.bf16.msra.mxu0 %v1598
      %2065 = vmatpush.bf16.msra.mxu0 %v1596
      %2066 = vmatpush.bf16.msra.mxu0 %v1594
      %2067 = vmatmul.bf16.gmra.mxu0 %v1781
      %v2068 = vpop.f32.mrf.mxu0
      %v2069 = vadd.f32 %v2040, %v2068
      %v2070 = vpop.f32.mrf.mxu0
      %v2071 = vadd.f32 %v2042, %v2070
      %2072 = vmatmul.bf16.gmra.mxu0 %v1786
      %v2073 = vpop.f32.mrf.mxu0
      %v2074 = vadd.f32 %v2045, %v2073
      %v2075 = vpop.f32.mrf.mxu0
      %v2076 = vadd.f32 %v2047, %v2075
      %2077 = vmatmul.bf16.gmra.mxu0 %v1791
      %v2078 = vpop.f32.mrf.mxu0
      %v2079 = vadd.f32 %v2050, %v2078
      %v2080 = vpop.f32.mrf.mxu0
      %v2081 = vadd.f32 %v2052, %v2080
      %2082 = vmatmul.bf16.gmra.mxu0 %v1796
      %v2083 = vpop.f32.mrf.mxu0
      %v2084 = vadd.f32 %v2055, %v2083
      %v2085 = vpop.f32.mrf.mxu0
      %v2086 = vadd.f32 %v2057, %v2085
      %2087 = vdwg.mxu0
      %2088 = vmatpush.bf16.msra.mxu0 0
      %2089 = vmatpush.bf16.msra.mxu0 0
      %2090 = vmatpush.bf16.msra.mxu0 0
      %2091 = vmatpush.bf16.msra.mxu0 0
      %2092 = vmatpush.bf16.msra.mxu0 %v1681
      %2093 = vmatpush.bf16.msra.mxu0 %v1679
      %2094 = vmatpush.bf16.msra.mxu0 %v1677
      %2095 = vmatpush.bf16.msra.mxu0 %v1675
      %2096 = vmatmul.bf16.gmra.mxu0 %v1816
      %v2097 = vpop.f32.mrf.mxu0
      %v2098 = vadd.f32 %v2069, %v2097
      %v2099 = vpop.f32.mrf.mxu0
      %v2100 = vadd.f32 %v2071, %v2099
      %2101 = vmatmul.bf16.gmra.mxu0 %v1819
      %v2102 = vpop.f32.mrf.mxu0
      %v2103 = vadd.f32 %v2074, %v2102
      %v2104 = vpop.f32.mrf.mxu0
      %v2105 = vadd.f32 %v2076, %v2104
      %2106 = vmatmul.bf16.gmra.mxu0 %v1822
      %v2107 = vpop.f32.mrf.mxu0
      %v2108 = vadd.f32 %v2079, %v2107
      %v2109 = vpop.f32.mrf.mxu0
      %v2110 = vadd.f32 %v2081, %v2109
      %2111 = vmatmul.bf16.gmra.mxu0 %v1825
      %v2112 = vpop.f32.mrf.mxu0
      %v2113 = vadd.f32 %v2084, %v2112
      %v2114 = vpop.f32.mrf.mxu0
      %v2115 = vadd.f32 %v2086, %v2114
      %2116 = vdwg.mxu0
      %v2117 = vld [vmem:[%s5] sm:$0xff]
      %v2118 = vld [vmem:[%s5 + $0x8] sm:$0xff]
      %v2119 = vld [vmem:[%s5 + $0x10] sm:$0xff]
      %v2120 = vld [vmem:[%s5 + $0x18] sm:$0xff]
      %v2121 = vld [vmem:[%s5 + $0x20] sm:$0xff]
      %v2122 = vld [vmem:[%s5 + $0x28] sm:$0xff]
      %v2123 = vld [vmem:[%s5 + $0x30] sm:$0xff]
      %v2124 = vld [vmem:[%s5 + $0x38] sm:$0xff]
      %2126 = vset.pattern.permute.xlu0 0
      %2127 = vperm.xlu0 %2126, %v2117
      %v2128 = vpop.permute.xlu0 %2127
      %2131 = vset.pattern.permute.xlu0 0
      %2132 = vperm.xlu0 %2131, %v2118
      %v2133 = vpop.permute.xlu0 %2132
      %2136 = vset.pattern.permute.xlu0 0
      %2137 = vperm.xlu0 %2136, %v2119
      %v2138 = vpop.permute.xlu0 %2137
      %2141 = vset.pattern.permute.xlu0 0
      %2142 = vperm.xlu0 %2141, %v2120
      %v2143 = vpop.permute.xlu0 %2142
      %2146 = vset.pattern.permute.xlu0 0
      %2147 = vperm.xlu0 %2146, %v2121
      %v2148 = vpop.permute.xlu0 %2147
      %2151 = vset.pattern.permute.xlu0 0
      %2152 = vperm.xlu0 %2151, %v2122
      %v2153 = vpop.permute.xlu0 %2152
      %2156 = vset.pattern.permute.xlu0 0
      %2157 = vperm.xlu0 %2156, %v2123
      %v2158 = vpop.permute.xlu0 %2157
      %2161 = vset.pattern.permute.xlu0 0
      %2162 = vperm.xlu0 %2161, %v2124
      %v2163 = vpop.permute.xlu0 %2162
      %v2165 = vmul.f32 %v1953, %v2128
      %v2166 = vmul.f32 %v2098, %v2128
      %v2167 = vmul.f32 %v1955, %v2133
      %v2168 = vmul.f32 %v2100, %v2133
      %v2169 = vmul.f32 %v1958, %v2138
      %v2170 = vmul.f32 %v2103, %v2138
      %v2171 = vmul.f32 %v1960, %v2143
      %v2172 = vmul.f32 %v2105, %v2143
      %v2173 = vmul.f32 %v1963, %v2148
      %v2174 = vmul.f32 %v2108, %v2148
      %v2175 = vmul.f32 %v1965, %v2153
      %v2176 = vmul.f32 %v2110, %v2153
      %v2177 = vmul.f32 %v1968, %v2158
      %v2178 = vmul.f32 %v2113, %v2158
      %v2179 = vmul.f32 %v1970, %v2163
      %v2180 = vmul.f32 %v2115, %v2163
      %v2181 = vld [vmem:[%s6] sm:$0xff]
      %v2182 = vld [vmem:[%s6 + $0x8] sm:$0xff]
      %v2183 = vld [vmem:[%s6 + $0x10] sm:$0xff]
      %v2184 = vld [vmem:[%s6 + $0x18] sm:$0xff]
      %v2185 = vld [vmem:[%s6 + $0x20] sm:$0xff]
      %v2186 = vld [vmem:[%s6 + $0x28] sm:$0xff]
      %v2187 = vld [vmem:[%s6 + $0x30] sm:$0xff]
      %v2188 = vld [vmem:[%s6 + $0x38] sm:$0xff]
      %2190 = vset.pattern.permute.xlu0 0
      %2191 = vperm.xlu0 %2190, %v2181
      %v2192 = vpop.permute.xlu0 %2191
      %2195 = vset.pattern.permute.xlu0 0
      %2196 = vperm.xlu0 %2195, %v2182
      %v2197 = vpop.permute.xlu0 %2196
      %2200 = vset.pattern.permute.xlu0 0
      %2201 = vperm.xlu0 %2200, %v2183
      %v2202 = vpop.permute.xlu0 %2201
      %2205 = vset.pattern.permute.xlu0 0
      %2206 = vperm.xlu0 %2205, %v2184
      %v2207 = vpop.permute.xlu0 %2206
      %2210 = vset.pattern.permute.xlu0 0
      %2211 = vperm.xlu0 %2210, %v2185
      %v2212 = vpop.permute.xlu0 %2211
      %2215 = vset.pattern.permute.xlu0 0
      %2216 = vperm.xlu0 %2215, %v2186
      %v2217 = vpop.permute.xlu0 %2216
      %2220 = vset.pattern.permute.xlu0 0
      %2221 = vperm.xlu0 %2220, %v2187
      %v2222 = vpop.permute.xlu0 %2221
      %2225 = vset.pattern.permute.xlu0 0
      %2226 = vperm.xlu0 %2225, %v2188
      %v2227 = vpop.permute.xlu0 %2226
      %v2229 = vadd.f32 %v2165, %v2192
      %v2230 = vadd.f32 %v2166, %v2192
      %v2231 = vadd.f32 %v2167, %v2197
      %v2232 = vadd.f32 %v2168, %v2197
      %v2233 = vadd.f32 %v2169, %v2202
      %v2234 = vadd.f32 %v2170, %v2202
      %v2235 = vadd.f32 %v2171, %v2207
      %v2236 = vadd.f32 %v2172, %v2207
      %v2237 = vadd.f32 %v2173, %v2212
      %v2238 = vadd.f32 %v2174, %v2212
      %v2239 = vadd.f32 %v2175, %v2217
      %v2240 = vadd.f32 %v2176, %v2217
      %v2241 = vadd.f32 %v2177, %v2222
      %v2242 = vadd.f32 %v2178, %v2222
      %v2243 = vadd.f32 %v2179, %v2227
      %v2244 = vadd.f32 %v2180, %v2227
      %v2245 = vmax.f32 %v2229, 0.0
      %v2246 = vmax.f32 %v2230, 0.0
      %v2247 = vmax.f32 %v2231, 0.0
      %v2248 = vmax.f32 %v2232, 0.0
      %v2249 = vmax.f32 %v2233, 0.0
      %v2250 = vmax.f32 %v2234, 0.0
      %v2251 = vmax.f32 %v2235, 0.0
      %v2252 = vmax.f32 %v2236, 0.0
      %v2253 = vmax.f32 %v2237, 0.0
      %v2254 = vmax.f32 %v2238, 0.0
      %v2255 = vmax.f32 %v2239, 0.0
      %v2256 = vmax.f32 %v2240, 0.0
      %v2257 = vmax.f32 %v2241, 0.0
      %v2258 = vmax.f32 %v2242, 0.0
      %v2259 = vmax.f32 %v2243, 0.0
      %v2260 = vmax.f32 %v2244, 0.0
      %v2261 = vpack.c.bf16 %v2246, %v2245
      %v2262 = vpack.c.bf16 %v2248, %v2247
      %v2263 = vpack.c.bf16 %v2250, %v2249
      %v2264 = vpack.c.bf16 %v2252, %v2251
      %v2265 = vpack.c.bf16 %v2254, %v2253
      %v2266 = vpack.c.bf16 %v2256, %v2255
      %v2267 = vpack.c.bf16 %v2258, %v2257
      %v2268 = vpack.c.bf16 %v2260, %v2259
      %v2277 = vunpack.c.l.b16 %v2261
      %v2278 = vunpack.c.h.b16 %v2261
      %v2279 = vunpack.c.l.b16 %v2262
      %v2280 = vunpack.c.h.b16 %v2262
      %v2281 = vunpack.c.l.b16 %v2263
      %v2282 = vunpack.c.h.b16 %v2263
      %v2283 = vunpack.c.l.b16 %v2264
      %v2284 = vunpack.c.h.b16 %v2264
      %v2285 = vunpack.c.l.b16 %v2265
      %v2286 = vunpack.c.h.b16 %v2265
      %v2287 = vunpack.c.l.b16 %v2266
      %v2288 = vunpack.c.h.b16 %v2266
      %v2289 = vunpack.c.l.b16 %v2267
      %v2290 = vunpack.c.h.b16 %v2267
      %v2291 = vunpack.c.l.b16 %v2268
      %v2292 = vunpack.c.h.b16 %v2268
      %v2293 = vpack.c.b16 %v2279, %v2277
      %v2294 = vpack.c.b16 %v2280, %v2278
      %v2295 = vpack.c.b16 %v2283, %v2281
      %v2296 = vpack.c.b16 %v2284, %v2282
      %v2297 = vpack.c.b16 %v2287, %v2285
      %v2298 = vpack.c.b16 %v2288, %v2286
      %v2299 = vpack.c.b16 %v2291, %v2289
      %v2300 = vpack.c.b16 %v2292, %v2290
      %v2309 = vld [vmem:[%s7] sm:$0xf]
      %v2310 = vld [vmem:[%s7 + $0x4] sm:$0xf]
      %v2311 = vld [vmem:[%s7 + $0x8] sm:$0xf]
      %v2312 = vld [vmem:[%s7 + $0xc] sm:$0xf]
      %v2317 = vunpack.c.l.b16 %v2309
      %v2318 = vunpack.c.l.b16 %v2310
      %v2319 = vunpack.c.l.b16 %v2311
      %v2320 = vunpack.c.l.b16 %v2312
      %v2321 = vpack.c.b16 %v2318, %v2317
      %v2322 = vpack.c.b16 %v2320, %v2319
      %vm2323 = vcmask 654336
      %v2325 = vsel %vm2323, %v2321, 0
      %v2328 = vsel %vm2323, %v2322, 0
      %2330 = vmatpush.bf16.msra.mxu0 0
      %2331 = vmatpush.bf16.msra.mxu0 0
      %2332 = vmatpush.bf16.msra.mxu0 0
      %2333 = vmatpush.bf16.msra.mxu0 %v347
      %2334 = vmatpush.bf16.msra.mxu0 %v2299
      %2335 = vmatpush.bf16.msra.mxu0 %v2297
      %2336 = vmatpush.bf16.msra.mxu0 %v2295
      %2337 = vmatpush.bf16.msra.mxu0 %v2293
      %2338 = vmatmul.bf16.gmra.mxu0 %v2325
      %v2339 = vpop.f32.mrf.mxu0
      %v2340 = vadd.f32 0.0, %v2339
      %v2341 = vpop.f32.mrf.mxu0
      %v2342 = vadd.f32 0.0, %v2341
      %2343 = vmatmul.bf16.gmra.mxu0 %v2328
      %v2344 = vpop.f32.mrf.mxu0
      %v2345 = vadd.f32 0.0, %v2344
      %v2346 = vpop.f32.mrf.mxu0
      %v2347 = vadd.f32 0.0, %v2346
      %2348 = vdwg.mxu0
      %2349 = vmatpush.bf16.msra.mxu0 0
      %2350 = vmatpush.bf16.msra.mxu0 0
      %2351 = vmatpush.bf16.msra.mxu0 0
      %2352 = vmatpush.bf16.msra.mxu0 %v348
      %2353 = vmatpush.bf16.msra.mxu0 %v2300
      %2354 = vmatpush.bf16.msra.mxu0 %v2298
      %2355 = vmatpush.bf16.msra.mxu0 %v2296
      %2356 = vmatpush.bf16.msra.mxu0 %v2294
      %2357 = vmatmul.bf16.gmra.mxu0 %v2325
      %v2358 = vpop.f32.mrf.mxu0
      %v2359 = vadd.f32 0.0, %v2358
      %v2360 = vpop.f32.mrf.mxu0
      %v2361 = vadd.f32 0.0, %v2360
      %2362 = vmatmul.bf16.gmra.mxu0 %v2328
      %v2363 = vpop.f32.mrf.mxu0
      %v2364 = vadd.f32 0.0, %v2363
      %v2365 = vpop.f32.mrf.mxu0
      %v2366 = vadd.f32 0.0, %v2365
      %2367 = vdwg.mxu0
      %2368 = vst [vmem:[%s305] sm:$0xff] %v2340
      %2369 = vst [vmem:[%s305 + $0x8] sm:$0xff] %v2359
      %2370 = vst [vmem:[%s305 + $0x10] sm:$0xff] %v2342
      %2371 = vst [vmem:[%s305 + $0x18] sm:$0xff] %v2361
      %2372 = vst [vmem:[%s305 + $0x20] sm:$0xff] %v2345
      %2373 = vst [vmem:[%s305 + $0x28] sm:$0xff] %v2364
      %2374 = vst [vmem:[%s305 + $0x30] sm:$0xff] %v2347
      %2375 = vst [vmem:[%s305 + $0x38] sm:$0xff] %v2366
      %p2376 = scmp.lt.s32.totalorder %s19, 1
      %s2377 = scalar_select %p2376, %s19, 1
      %s2378 = smul.addr %s2377, 8
      %s2379 = smul.addr %s2378, 8
      %s2380 = scalar_lea.vmem %s8, %s2379
      // Predicated region
      $region53: #{_lambda_.1} parent=51 // pred_check
        %p2381 = pneg %p210
      $region54: #{_lambda_.1} parent=51 // pred_check_branch
        %2383 = sbr.rel (%p2381) target = $region56
      $region55: #{_lambda_.1} parent=51 // pred_region
        _
      $region56: #{_lambda_.1} parent=51 // pred_fallthru
        _
    $region52: #{_lambda_.1} parent=5 // pred_fallthru
      _
    %p2384 = scmp.le.s32.totalorder 2, %s14
    // Predicated region
    $region57: #{_lambda_.1} parent=5 // pred_check
      %p2385 = pneg %p2384
    $region58: #{_lambda_.1} parent=5 // pred_check_branch
      %2387 = sbr.rel (%p2385) target = $region60
    $region59: #{_lambda_.1} parent=5 // pred_region
      %s2388 = ssub.s32 %s14, 2
      // Predicated region
      $region61: #{_lambda_.1} parent=59 // pred_check
        %p2389 = pneg %p216
      $region62: #{_lambda_.1} parent=59 // pred_check_branch
        %2391 = sbr.rel (%p2389) target = $region64
      $region63: #{_lambda_.1} parent=59 // pred_region
        %p2392 = scmp.lt.s32.totalorder %s20, 1
        %s2393 = scalar_select %p2392, %s20, 1
        %s2394 = smul.addr %s2393, 8
        %s2395 = smul.addr %s2394, 8
        %s2396 = scalar_lea.vmem %s8, %s2395
      $region64: #{_lambda_.1} parent=59 // pred_fallthru
        _
    $region60: #{_lambda_.1} parent=5 // pred_fallthru
      _
  $region6: #{_lambda_.1} parent=0 // loop_footer
    %s18 = sadd.s32 1, %s14
  $region7: #{_lambda_.1} parent=0 // loop_footer_branch
    %13 = sbr.rel target = $region3
  $region8: #{_lambda_.1} parent=0 // loop_exit
    _

</llo_original>
